<compile_context>
chip_gen: v5e
topology: v5e:2x2
jax: 0.10.0
libtpu: 0.0.40
codegen_flags: <defaults>
</compile_context>

<pallas_src>
import functools

import jax
import jax.numpy as jnp
from jax import lax
from jax.experimental import pallas as pl
from jax.experimental.pallas import tpu as pltpu

_INV_SQRT2 = 0.7071067811865476  # 1/sqrt(2), exact (erf-based) GELU constant


def _round_up(x, m):
    return ((x + m - 1) // m) * m


def _pick_th(H, th_req):
    """Largest multiple of 128 that divides H and is <= th_req (fallback: H)."""
    best = 0
    cand = 128
    cap = min(th_req, H)
    while cand <= cap:
        if H % cand == 0:
            best = cand
        cand += 128
    return best if best > 0 else H


def _vmem_capacity_bytes():
    try:
        return int(pltpu.get_tpu_info().vmem_capacity_bytes)
    except Exception:
        return 64 * 1024 * 1024  # conservative: v7x per-TensorCore VMEM


def _vmem_need_bytes(tm, th, C, H, w_isz, in_isz, out_isz, resident, use_scratch):
    """Conservative working-set estimate (assumes double-buffered operands)."""
    need = 2 * tm * C * in_isz          # x tile (double-buffered)
    need += 2 * tm * C * out_isz        # output tile
    if use_scratch:
        need += tm * C * 4              # f32 accumulator scratch
    if resident:
        need += 2 * (C * H * w_isz + H * C * w_isz + H * 4)    # W1 + W2 + b1
    else:
        need += 2 * (C * th * w_isz + th * C * w_isz + th * 4)  # per-slab
    need += 2 * C * 4                   # b2
    need += tm * th * 8                 # (tm, th) f32 GELU intermediate + cast copy
    need += 2 * 1024 * 1024             # compiler-internal slack
    return need


def mlp_kernel(*refs, resident, use_scratch):
    # Grid: (row tiles "parallel", hidden slabs "arbitrary" = reduction axis).
    if use_scratch:
        x_ref, w1_ref, b1_ref, w2_ref, b2_ref, o_ref, acc_ref = refs
    else:
        x_ref, w1_ref, b1_ref, w2_ref, b2_ref, o_ref = refs
        acc_ref = o_ref  # f32 output block is resident across h -> accumulate in place

    h = pl.program_id(1)
    n_h = pl.num_programs(1)

    if resident:
        # Whole weight tensors live in VMEM (constant index_map); pick the
        # hidden slab by leading-axis index.
        w1_blk = w1_ref[h]          # (C, th)
        b1_blk = b1_ref[h]          # (1, th)
        w2_blk = w2_ref[h]          # (th, C)
    else:
        # Streamed slabs: the BlockSpec already delivers the h-th slab.
        w1_blk = w1_ref[0]
        b1_blk = b1_ref[0]
        w2_blk = w2_ref[0]

    # First linear on this hidden slab: (tm, C) @ (C, th) -> f32, + b1 slab.
    a = jnp.dot(x_ref[...], w1_blk, preferred_element_type=jnp.float32)
    a = a + b1_blk

    # Exact GELU (nn.GELU() default, erf-based) in f32 on the VPU.
    a = 0.5 * a * (1.0 + lax.erf(a * _INV_SQRT2))

    # Partial second linear: (tm, th) @ (th, C), f32 accumulation.
    part = jnp.dot(a.astype(w2_blk.dtype), w2_blk,
                   preferred_element_type=jnp.float32)

    @pl.when(h == 0)
    def _():
        acc_ref[...] = part         # first slab initializes (no zero-fill pass)

    @pl.when(h > 0)
    def _():
        acc_ref[...] += part

    @pl.when(h == n_h - 1)
    def _():
        o_ref[...] = (acc_ref[...] + b2_ref[...]).astype(o_ref.dtype)


def mlp_forward(x, w1, b1, w2, b2, *, tm=1024, th=512, use_bf16=True):
    """x: (B, T, C). w1: (C, H), b1: (H,), w2: (H, C), b2: (C,). Returns (B, T, C)."""
    orig_dtype = x.dtype
    B, T, C = x.shape
    H = w1.shape[1]
    M = B * T

    mxu_dtype = jnp.bfloat16 if use_bf16 else x.dtype
    in_isz = jnp.dtype(mxu_dtype).itemsize
    w_isz = in_isz
    out_isz = jnp.dtype(orig_dtype).itemsize
    use_scratch = jnp.dtype(orig_dtype) != jnp.dtype(jnp.float32)

    # Hidden tile: largest 128-multiple divisor of H that is <= th.
    th_eff = _pick_th(H, th)
    grid_h = H // th_eff

    # Row tile: multiples of the sublane group for the MXU dtype, capped so the
    # "parallel" M axis has >= 2 tiles when M is large enough (v7x: 2 TCs).
    sub = max(8, 32 // in_isz)
    tm_upper = max(sub, min(tm, _round_up(M, sub)))
    if M >= 2 * sub:
        tm_upper = min(tm_upper, _round_up((M + 1) // 2, sub))

    cap = _vmem_capacity_bytes()
    usable = int(cap * 0.8)

    # Prefer resident weights at the largest row tile that fits; otherwise
    # stream slabs; shrink tm until something fits.
    tm_eff = tm_upper
    resident = True
    while True:
        if _vmem_need_bytes(tm_eff, th_eff, C, H, w_isz, in_isz, out_isz,
                            True, use_scratch) <= usable:
            resident = True
            break
        if _vmem_need_bytes(tm_eff, th_eff, C, H, w_isz, in_isz, out_isz,
                            False, use_scratch) <= usable:
            resident = False
            break
        if tm_eff <= sub:
            resident = False
            break
        tm_eff = max(sub, _round_up(tm_eff // 2, sub))

    M_pad = _round_up(M, tm_eff)
    grid_m = M_pad // tm_eff

    x2 = x.reshape(M, C).astype(mxu_dtype)
    if M_pad != M:
        x2 = jnp.pad(x2, ((0, M_pad - M), (0, 0)))

    # Weights laid out as (grid_h, ...) slabs so the kernel selects the hidden
    # slab by leading-axis index (resident) or gets it from the BlockSpec.
    w1r = w1.astype(mxu_dtype).reshape(C, grid_h, th_eff).transpose(1, 0, 2)  # (gh, C, th)
    w2r = w2.astype(mxu_dtype).reshape(grid_h, th_eff, C)                     # (gh, th, C)
    b1r = b1.astype(jnp.float32).reshape(grid_h, 1, th_eff)                   # (gh, 1, th)
    b2r = b2.astype(jnp.float32).reshape(1, C)

    if resident:
        w1_spec = pl.BlockSpec((grid_h, C, th_eff), lambda i, h: (0, 0, 0))
        b1_spec = pl.BlockSpec((grid_h, 1, th_eff), lambda i, h: (0, 0, 0))
        w2_spec = pl.BlockSpec((grid_h, th_eff, C), lambda i, h: (0, 0, 0))
    else:
        w1_spec = pl.BlockSpec((1, C, th_eff), lambda i, h: (h, 0, 0))
        b1_spec = pl.BlockSpec((1, 1, th_eff), lambda i, h: (h, 0, 0))
        w2_spec = pl.BlockSpec((1, th_eff, C), lambda i, h: (h, 0, 0))

    scratch_shapes = [pltpu.VMEM((tm_eff, C), jnp.float32)] if use_scratch else []

    weight_bytes = (C * H + H * C) * w_isz
    cost = pl.CostEstimate(
        flops=4 * M_pad * C * H,                 # two matmuls: 2*M*C*H each
        transcendentals=M_pad * H,               # erf per hidden activation
        bytes_accessed=(
            M_pad * C * in_isz                   # x
            + (1 if resident else grid_m) * weight_bytes
            + (H + C) * 4                        # biases (f32)
            + M_pad * C * out_isz                # output
        ),
    )

    need = _vmem_need_bytes(tm_eff, th_eff, C, H, w_isz, in_isz, out_isz,
                            resident, use_scratch)
    vmem_limit = int(min(cap * 0.9, max(need + (4 << 20), 32 << 20)))

    kernel = functools.partial(mlp_kernel, resident=resident, use_scratch=use_scratch)

    out = pl.pallas_call(
        kernel,
        out_shape=jax.ShapeDtypeStruct((M_pad, C), orig_dtype),
        grid_spec=pltpu.PrefetchScalarGridSpec(
            num_scalar_prefetch=0,
            grid=(grid_m, grid_h),
            in_specs=[
                pl.BlockSpec((tm_eff, C), lambda i, h: (i, 0)),   # x row tile
                w1_spec,                                          # W1 slabs
                b1_spec,                                          # b1 slabs
                w2_spec,                                          # W2 slabs
                pl.BlockSpec((1, C), lambda i, h: (0, 0)),        # b2 (tiny)
            ],
            out_specs=pl.BlockSpec((tm_eff, C), lambda i, h: (i, 0)),
            scratch_shapes=scratch_shapes,
        ),
        compiler_params=pltpu.CompilerParams(
            dimension_semantics=("parallel", "arbitrary"),
            vmem_limit_bytes=vmem_limit,
        ),
        cost_estimate=cost,
    )(x2, w1r, b1r, w2r, b2r)

    if M_pad != M:
        out = out[:M]
    return out.reshape(B, T, C)


def init_params(key, n_embed):
    """Deterministic init mimicking nn.Linear's uniform(-1/sqrt(fan_in), 1/sqrt(fan_in))."""
    h = 4 * n_embed
    k1, k2, k3, k4 = jax.random.split(key, 4)
    lim1 = 1.0 / jnp.sqrt(jnp.float32(n_embed))
    lim2 = 1.0 / jnp.sqrt(jnp.float32(h))
    w1 = jax.random.uniform(k1, (n_embed, h), jnp.float32, -lim1, lim1)
    b1 = jax.random.uniform(k2, (h,), jnp.float32, -lim1, lim1)
    w2 = jax.random.uniform(k3, (h, n_embed), jnp.float32, -lim2, lim2)
    b2 = jax.random.uniform(k4, (n_embed,), jnp.float32, -lim2, lim2)
    return w1, b1, w2, b2


def mlp_reference(x, w1, b1, w2, b2):
    h = x @ w1 + b1
    h = 0.5 * h * (1.0 + lax.erf(h * _INV_SQRT2))
    return h @ w2 + b2


if __name__ == "__main__":
    # Config-consistent small shapes: n_embed=384 (hidden 1536), batch=2, seq=8.
    n_embed = 384
    B, T = 2, 8

    key = jax.random.PRNGKey(0)
    kx, kp = jax.random.split(key)
    x = jax.random.normal(kx, (B, T, n_embed), jnp.float32)
    w1, b1, w2, b2 = init_params(kp, n_embed)

    ref = mlp_reference(x, w1, b1, w2, b2)

    # f32 MXU path: exact semantics, tight tolerance.
    out_f32 = jax.block_until_ready(mlp_forward(x, w1, b1, w2, b2, use_bf16=False))
    assert out_f32.shape == (B, T, n_embed)
    assert jnp.allclose(out_f32, ref, atol=1e-4, rtol=1e-4), "f32 path mismatch"

    # bf16-MXU / f32-accumulate fast path (f32 in/out -> accumulate in o_ref).
    out_bf16 = jax.block_until_ready(mlp_forward(x, w1, b1, w2, b2, use_bf16=True))
    assert out_bf16.shape == (B, T, n_embed)
    assert jnp.allclose(out_bf16, ref, atol=5e-2, rtol=5e-2), "bf16 MXU path mismatch"

    # Fully-bf16 activations (exercises the f32 scratch-accumulator finalize path).
    out_act16 = jax.block_until_ready(
        mlp_forward(x.astype(jnp.bfloat16), w1, b1, w2, b2, use_bf16=True))
    assert out_act16.shape == (B, T, n_embed) and out_act16.dtype == jnp.bfloat16
    assert jnp.allclose(out_act16.astype(jnp.float32), ref, atol=1e-1, rtol=1e-1), \
        "bf16 activation path mismatch"

    print("KERNEL_OK")
</pallas_src>

<mosaic_0001>
module attributes {stable_mosaic.version = 11 : i64} {
  func.func @mlp_kernel(%arg0: i32, %arg1: i32, %arg2: memref<8x384xf32, #tpu.memory_space<vmem>>, %arg3: memref<3x384x512xf32, #tpu.memory_space<vmem>>, %arg4: memref<3x1x512xf32, #tpu.memory_space<vmem>>, %arg5: memref<3x512x384xf32, #tpu.memory_space<vmem>>, %arg6: memref<1x384xf32, #tpu.memory_space<vmem>>, %arg7: memref<8x384xf32, #tpu.memory_space<vmem>>) attributes {dimension_semantics = [#tpu.dimension_semantics<parallel>, #tpu.dimension_semantics<arbitrary>], iteration_bounds = array<i64: 2, 3>, scalar_prefetch = 0 : i64, scratch_operands = 0 : i64, tpu.core_type = #tpu.core_type<tc>, window_params = [{transform_indices = @transform_0, window_bounds = array<i64: 8, 384>}, {pipeline_mode = #tpu.pipeline_mode<synchronous>, transform_indices = @transform_1, window_bounds = array<i64: 3, 384, 512>}, {pipeline_mode = #tpu.pipeline_mode<synchronous>, transform_indices = @transform_2, window_bounds = array<i64: 3, 1, 512>}, {pipeline_mode = #tpu.pipeline_mode<synchronous>, transform_indices = @transform_3, window_bounds = array<i64: 3, 512, 384>}, {pipeline_mode = #tpu.pipeline_mode<synchronous>, transform_indices = @transform_4, window_bounds = array<i64: 1, 384>}, {transform_indices = @transform_5, window_bounds = array<i64: 8, 384>}]} {
    %0 = arith.index_cast %arg1 : i32 to index
    %c0 = arith.constant 0 : index
    %c0_0 = arith.constant 0 : index
    %1 = vector.load %arg3[%0, %c0, %c0_0] : memref<3x384x512xf32, #tpu.memory_space<vmem>>, vector<1x384x512xf32>
    %2 = vector.shape_cast %1 : vector<1x384x512xf32> to vector<384x512xf32>
    %3 = arith.index_cast %arg1 : i32 to index
    %c0_1 = arith.constant 0 : index
    %c0_2 = arith.constant 0 : index
    %4 = vector.load %arg4[%3, %c0_1, %c0_2] : memref<3x1x512xf32, #tpu.memory_space<vmem>>, vector<1x1x512xf32>
    %5 = vector.shape_cast %4 : vector<1x1x512xf32> to vector<1x512xf32>
    %6 = arith.index_cast %arg1 : i32 to index
    %c0_3 = arith.constant 0 : index
    %c0_4 = arith.constant 0 : index
    %7 = vector.load %arg5[%6, %c0_3, %c0_4] : memref<3x512x384xf32, #tpu.memory_space<vmem>>, vector<1x512x384xf32>
    %8 = vector.shape_cast %7 : vector<1x512x384xf32> to vector<512x384xf32>
    %c0_5 = arith.constant 0 : index
    %c0_6 = arith.constant 0 : index
    %9 = vector.load %arg2[%c0_5, %c0_6] : memref<8x384xf32, #tpu.memory_space<vmem>>, vector<8x384xf32>
    %cst = arith.constant dense<0.000000e+00> : vector<8x512xf32>
    %10 = tpu.matmul %9, %2, %cst {dimension_numbers = #tpu.dot_dimension_numbers<[1], [0], [0], [1], [0, 0, 1, 1], [], []>} : vector<8x384xf32>, vector<384x512xf32>, vector<8x512xf32> -> vector<8x512xf32>
    %11 = vector.broadcast %5 : vector<1x512xf32> to vector<8x512xf32>
    %12 = arith.addf %10, %11 : vector<8x512xf32>
    %cst_7 = arith.constant 5.000000e-01 : f32
    %13 = vector.broadcast %cst_7 : f32 to vector<8x512xf32>
    %14 = arith.mulf %13, %12 : vector<8x512xf32>
    %cst_8 = arith.constant 0.707106769 : f32
    %15 = vector.broadcast %cst_8 : f32 to vector<8x512xf32>
    %16 = arith.mulf %12, %15 : vector<8x512xf32>
    %17 = math.erf %16 : vector<8x512xf32>
    %cst_9 = arith.constant 1.000000e+00 : f32
    %18 = vector.broadcast %cst_9 : f32 to vector<8x512xf32>
    %19 = arith.addf %18, %17 : vector<8x512xf32>
    %20 = arith.mulf %14, %19 : vector<8x512xf32>
    %cst_10 = arith.constant dense<0.000000e+00> : vector<8x384xf32>
    %21 = tpu.matmul %20, %8, %cst_10 {dimension_numbers = #tpu.dot_dimension_numbers<[1], [0], [0], [1], [0, 0, 1, 1], [], []>} : vector<8x512xf32>, vector<512x384xf32>, vector<8x384xf32> -> vector<8x384xf32>
    %c0_i32 = arith.constant 0 : i32
    %22 = arith.cmpi eq, %arg1, %c0_i32 : i32
    %23 = arith.extui %22 : i1 to i32
    %c0_i32_11 = arith.constant 0 : i32
    %24 = arith.cmpi ne, %23, %c0_i32_11 : i32
    scf.if %24 {
      %c0_15 = arith.constant 0 : index
      %c0_16 = arith.constant 0 : index
      %31 = vector.load %arg7[%c0_15, %c0_16] : memref<8x384xf32, #tpu.memory_space<vmem>>, vector<8x384xf32>
      tpu.vector_store %arg7[%c0_15, %c0_16], %21 {strides = array<i32>} : memref<8x384xf32, #tpu.memory_space<vmem>>, vector<8x384xf32>,
    } else {
    }
    %c0_i32_12 = arith.constant 0 : i32
    %25 = arith.cmpi sgt, %arg1, %c0_i32_12 : i32
    %26 = arith.extui %25 : i1 to i32
    %c0_i32_13 = arith.constant 0 : i32
    %27 = arith.cmpi ne, %26, %c0_i32_13 : i32
    scf.if %27 {
      %c0_15 = arith.constant 0 : index
      %c0_16 = arith.constant 0 : index
      %31 = vector.load %arg7[%c0_15, %c0_16] : memref<8x384xf32, #tpu.memory_space<vmem>>, vector<8x384xf32>
      %32 = arith.addf %31, %21 : vector<8x384xf32>
      %c0_17 = arith.constant 0 : index
      %c0_18 = arith.constant 0 : index
      %33 = vector.load %arg7[%c0_17, %c0_18] : memref<8x384xf32, #tpu.memory_space<vmem>>, vector<8x384xf32>
      tpu.vector_store %arg7[%c0_17, %c0_18], %32 {strides = array<i32>} : memref<8x384xf32, #tpu.memory_space<vmem>>, vector<8x384xf32>,
    } else {
    }
    %c2_i32 = arith.constant 2 : i32
    %28 = arith.cmpi eq, %arg1, %c2_i32 : i32
    %29 = arith.extui %28 : i1 to i32
    %c0_i32_14 = arith.constant 0 : i32
    %30 = arith.cmpi ne, %29, %c0_i32_14 : i32
    scf.if %30 {
      %c0_15 = arith.constant 0 : index
      %c0_16 = arith.constant 0 : index
      %31 = vector.load %arg7[%c0_15, %c0_16] : memref<8x384xf32, #tpu.memory_space<vmem>>, vector<8x384xf32>
      %c0_17 = arith.constant 0 : index
      %c0_18 = arith.constant 0 : index
      %32 = vector.load %arg6[%c0_17, %c0_18] : memref<1x384xf32, #tpu.memory_space<vmem>>, vector<1x384xf32>
      %33 = vector.broadcast %32 : vector<1x384xf32> to vector<8x384xf32>
      %34 = arith.addf %31, %33 : vector<8x384xf32>
      %c0_19 = arith.constant 0 : index
      %c0_20 = arith.constant 0 : index
      %35 = vector.load %arg7[%c0_19, %c0_20] : memref<8x384xf32, #tpu.memory_space<vmem>>, vector<8x384xf32>
      tpu.vector_store %arg7[%c0_19, %c0_20], %34 {strides = array<i32>} : memref<8x384xf32, #tpu.memory_space<vmem>>, vector<8x384xf32>,
    } else {
    }
    return
  }
  func.func @transform_0(%arg0: i32, %arg1: i32) -> (i32, i32) {
    %c0_i32 = arith.constant 0 : i32
    %c0_i32_0 = arith.constant 0 : i32
    return %arg0, %c0_i32 : i32, i32
  }
  func.func @transform_1(%arg0: i32, %arg1: i32) -> (i32, i32, i32) {
    %c0_i32 = arith.constant 0 : i32
    %c0_i32_0 = arith.constant 0 : i32
    %c0_i32_1 = arith.constant 0 : i32
    %c0_i32_2 = arith.constant 0 : i32
    return %c0_i32, %c0_i32_0, %c0_i32_1 : i32, i32, i32
  }
  func.func @transform_2(%arg0: i32, %arg1: i32) -> (i32, i32, i32) {
    %c0_i32 = arith.constant 0 : i32
    %c0_i32_0 = arith.constant 0 : i32
    %c0_i32_1 = arith.constant 0 : i32
    %c0_i32_2 = arith.constant 0 : i32
    return %c0_i32, %c0_i32_0, %c0_i32_1 : i32, i32, i32
  }
  func.func @transform_3(%arg0: i32, %arg1: i32) -> (i32, i32, i32) {
    %c0_i32 = arith.constant 0 : i32
    %c0_i32_0 = arith.constant 0 : i32
    %c0_i32_1 = arith.constant 0 : i32
    %c0_i32_2 = arith.constant 0 : i32
    return %c0_i32, %c0_i32_0, %c0_i32_1 : i32, i32, i32
  }
  func.func @transform_4(%arg0: i32, %arg1: i32) -> (i32, i32) {
    %c0_i32 = arith.constant 0 : i32
    %c0_i32_0 = arith.constant 0 : i32
    %c0_i32_1 = arith.constant 0 : i32
    return %c0_i32, %c0_i32_0 : i32, i32
  }
  func.func @transform_5(%arg0: i32, %arg1: i32) -> (i32, i32) {
    %c0_i32 = arith.constant 0 : i32
    %c0_i32_0 = arith.constant 0 : i32
    return %arg0, %c0_i32 : i32, i32
  }
}

</mosaic_0001>

<llo_original>
// kernel: tpu_custom_call.1
$region0: #{tpu_custom_call.1}
  #allocation0 [shape = 'u32[]', space=smem, size = 0x4, offset = 0x4, fixed_abs, tag = 'smem constant byte address 0x4 - core index']
  #allocation1 [shape = 'u32[72,128]{1,0:T(1,128)}', space=vmem, size = 0x9000, scoped, tag = 'internal scratch']
  %s0 = inlined_call_operand.hbm [shape: f32[16,384], index: 0, kind: input, shape index: {}]
  %s1 = inlined_call_operand.hbm [shape: f32[3,384,512], index: 1, kind: input, shape index: {}]
  %s2 = inlined_call_operand.hbm [shape: f32[3,1,512], index: 2, kind: input, shape index: {}]
  %s3 = inlined_call_operand.hbm [shape: f32[3,512,384], index: 3, kind: input, shape index: {}]
  %s4 = inlined_call_operand.hbm [shape: f32[1,384], index: 4, kind: input, shape index: {}]
  %s5 = inlined_call_operand.hbm [shape: f32[16,384], index: 5, kind: output, shape index: {}]
  %s6 = sld [smem:[#allocation0]]
  $region85: #{tpu_custom_call.1} parent=0
    _
  %s8 = ssub.s32 1, %s6
  %s9 = scalar_select 0, %s8, %s6
  $region1: #{tpu_custom_call.1} parent=0
    #allocation2 [shape = 'u8[24576]{0}', space=vmem, size = 0x6000, scoped, tag = 'input window, operand 0']
    #allocation3 [shape = 's32[2]{0}', space=sflag, size = 0x8, scoped, tag = 'scoped memory for tpu_custom_call.1']
    #allocation4 [shape = 's32[2]{0}', space=sflag, size = 0x8, scoped, tag = 'scoped memory for tpu_custom_call.1']
    #allocation5 [shape = 'u8[2359296]{0}', space=vmem, size = 0x240000, scoped, tag = 'input window, operand 1, single buffered']
    #allocation6 [shape = 's32[1]{0}', space=sflag, size = 0x4, scoped, tag = 'scoped memory for tpu_custom_call.1']
    #allocation7 [shape = 'u8[6144]{0}', space=vmem, size = 0x1800, scoped, tag = 'input window, operand 2, single buffered']
    #allocation8 [shape = 'u8[2359296]{0}', space=vmem, size = 0x240000, scoped, tag = 'input window, operand 3, single buffered']
    #allocation9 [shape = 's32[1]{0}', space=sflag, size = 0x4, scoped, tag = 'scoped memory for tpu_custom_call.1']
    #allocation10 [shape = 'u8[1536]{0}', space=vmem, size = 0x800, scoped, tag = 'input window, operand 4, single buffered']
    #allocation11 [shape = 'u8[24576]{0}', space=vmem, size = 0x6000, scoped, tag = 'output window, operand 0']
    %10 = vsyncpa [#allocation3], 0
    %s11 = scalar_lea.sflag [#allocation3], 1
    %12 = vsyncpa %s11, 0
    %13 = vsyncpa [#allocation6], 0
    %14 = vsyncpa [#allocation9], 0
    %15 = vsyncpa [#allocation4], 0
    %s16 = scalar_lea.sflag [#allocation4], 1
    %17 = vsyncpa %s16, 0
    loop: start=0, step=1, limit=8
    $region2: #{tpu_custom_call.1} parent=1 // loop_pre_header
      _
    $region3: #{tpu_custom_call.1} parent=1 // loop_header
      %s19 = sphi 0, %s23
      %p20 = scmp.ge.s32.totalorder %s19, 8
      %s26 = sphi 0, %s38
      %s27 = sphi 0, %s34
      %s28 = sphi 0, %s26
      %s29 = sphi 0, %s27
      %s30 = sphi 0, %s28
      %s31 = sphi 0, %s29
      %s41 = sphi 0, %s43
      %s44 = sphi 0, %s41
      %s45 = sphi 0, %s44
      %s61 = sphi 0, %s45
      %s65 = sphi 0, %s65
      %s67 = sphi 0, %s65
      %s68 = sphi 0, %s67
      %s82 = sphi 0, %s68
      %s86 = sphi 0, %s86
      %s88 = sphi 0, %s86
      %s89 = sphi 0, %s88
      %s103 = sphi 0, %s89
      %s107 = sphi 0, %s107
      %s109 = sphi 0, %s107
      %s110 = sphi 0, %s109
      %s124 = sphi 0, %s110
      %s128 = sphi 0, %s128
      %s130 = sphi 0, %s128
      %s131 = sphi 0, %s130
      %s145 = sphi 0, %s131
      %s151 = sphi 0, %s153
      %s154 = sphi 0, %s151
      %s155 = sphi 0, %s154
      %s171 = sphi 0, %s155
    $region4: #{tpu_custom_call.1} parent=1 // loop_header_branch
      %22 = sbr.rel (%p20) target = $region8
    $region5: #{tpu_custom_call.1} parent=1 // loop_body
      %s24 = ssub.s32 %s19, 1
      %s25 = ssub.s32 %s19, 2
      %s32 = sadd.s32 1, %s27
      %p33 = scmp.ge.s32.totalorder %s32, 3
      %s34 = scalar_select %p33, 0, %s32
      %s35 = sadd.s32 1, %s26
      %s36 = scalar_select %p33, %s35, %s26
      %p37 = scmp.ge.s32.totalorder %s36, 2
      %s38 = scalar_select %p37, 0, %s36
      %s39 = ssub.s32 %s26, %s38
      %p40 = scmp.eq.s32.totalorder %s39, 0
      %s42 = sadd.s32 %s41, 1
      %s43 = scalar_select %p40, %s41, %s42
      %p46 = pneg %p40
      %p47 = scmp.eq.s32.totalorder %s19, 5
      %p48 = por %p46, %p47
      %p49 = scmp.ne.s32.totalorder %s41, %s44
      %p50 = scmp.eq.s32.totalorder %s19, 0
      %p51 = por %p49, %p50
      %p52 = scmp.ne.s32.totalorder %s41, %s44
      %p53 = scmp.eq.s32.totalorder %s24, 5
      %p54 = por %p52, %p53
      %p55 = scmp.ne.s32.totalorder %s44, %s45
      %p56 = scmp.eq.s32.totalorder %s24, 0
      %p57 = por %p55, %p56
      %p58 = scmp.ne.s32.totalorder %s44, %s45
      %p59 = scmp.eq.s32.totalorder %s25, 5
      %p60 = por %p58, %p59
      %p62 = scmp.ne.s32.totalorder %s45, %s61
      %p63 = scmp.eq.s32.totalorder %s25, 0
      %p64 = por %p62, %p63
      %s66 = sadd.s32 %s65, 1
      %p69 = scmp.eq.s32.totalorder %s19, 5
      %p70 = scmp.ne.s32.totalorder %s65, %s67
      %p71 = scmp.eq.s32.totalorder %s19, 0
      %p72 = por %p70, %p71
      %p73 = scmp.ne.s32.totalorder %s65, %s67
      %p74 = scmp.eq.s32.totalorder %s24, 5
      %p75 = por %p73, %p74
      %p76 = scmp.ne.s32.totalorder %s67, %s68
      %p77 = scmp.eq.s32.totalorder %s24, 0
      %p78 = por %p76, %p77
      %p79 = scmp.ne.s32.totalorder %s67, %s68
      %p80 = scmp.eq.s32.totalorder %s25, 5
      %p81 = por %p79, %p80
      %p83 = scmp.ne.s32.totalorder %s68, %s82
      %p84 = scmp.eq.s32.totalorder %s25, 0
      %p85 = por %p83, %p84
      %s87 = sadd.s32 %s86, 1
      %p90 = scmp.eq.s32.totalorder %s19, 5
      %p91 = scmp.ne.s32.totalorder %s86, %s88
      %p92 = scmp.eq.s32.totalorder %s19, 0
      %p93 = por %p91, %p92
      %p94 = scmp.ne.s32.totalorder %s86, %s88
      %p95 = scmp.eq.s32.totalorder %s24, 5
      %p96 = por %p94, %p95
      %p97 = scmp.ne.s32.totalorder %s88, %s89
      %p98 = scmp.eq.s32.totalorder %s24, 0
      %p99 = por %p97, %p98
      %p100 = scmp.ne.s32.totalorder %s88, %s89
      %p101 = scmp.eq.s32.totalorder %s25, 5
      %p102 = por %p100, %p101
      %p104 = scmp.ne.s32.totalorder %s89, %s103
      %p105 = scmp.eq.s32.totalorder %s25, 0
      %p106 = por %p104, %p105
      %s108 = sadd.s32 %s107, 1
      %p111 = scmp.eq.s32.totalorder %s19, 5
      %p112 = scmp.ne.s32.totalorder %s107, %s109
      %p113 = scmp.eq.s32.totalorder %s19, 0
      %p114 = por %p112, %p113
      %p115 = scmp.ne.s32.totalorder %s107, %s109
      %p116 = scmp.eq.s32.totalorder %s24, 5
      %p117 = por %p115, %p116
      %p118 = scmp.ne.s32.totalorder %s109, %s110
      %p119 = scmp.eq.s32.totalorder %s24, 0
      %p120 = por %p118, %p119
      %p121 = scmp.ne.s32.totalorder %s109, %s110
      %p122 = scmp.eq.s32.totalorder %s25, 5
      %p123 = por %p121, %p122
      %p125 = scmp.ne.s32.totalorder %s110, %s124
      %p126 = scmp.eq.s32.totalorder %s25, 0
      %p127 = por %p125, %p126
      %s129 = sadd.s32 %s128, 1
      %p132 = scmp.eq.s32.totalorder %s19, 5
      %p133 = scmp.ne.s32.totalorder %s128, %s130
      %p134 = scmp.eq.s32.totalorder %s19, 0
      %p135 = por %p133, %p134
      %p136 = scmp.ne.s32.totalorder %s128, %s130
      %p137 = scmp.eq.s32.totalorder %s24, 5
      %p138 = por %p136, %p137
      %p139 = scmp.ne.s32.totalorder %s130, %s131
      %p140 = scmp.eq.s32.totalorder %s24, 0
      %p141 = por %p139, %p140
      %p142 = scmp.ne.s32.totalorder %s130, %s131
      %p143 = scmp.eq.s32.totalorder %s25, 5
      %p144 = por %p142, %p143
      %p146 = scmp.ne.s32.totalorder %s131, %s145
      %p147 = scmp.eq.s32.totalorder %s25, 0
      %p148 = por %p146, %p147
      %s149 = ssub.s32 %s26, %s38
      %p150 = scmp.eq.s32.totalorder %s149, 0
      %s152 = sadd.s32 %s151, 1
      %s153 = scalar_select %p150, %s151, %s152
      %p156 = pneg %p150
      %p157 = scmp.eq.s32.totalorder %s19, 5
      %p158 = por %p156, %p157
      %p159 = scmp.ne.s32.totalorder %s151, %s154
      %p160 = scmp.eq.s32.totalorder %s19, 0
      %p161 = por %p159, %p160
      %p162 = scmp.ne.s32.totalorder %s151, %s154
      %p163 = scmp.eq.s32.totalorder %s24, 5
      %p164 = por %p162, %p163
      %p165 = scmp.ne.s32.totalorder %s154, %s155
      %p166 = scmp.eq.s32.totalorder %s24, 0
      %p167 = por %p165, %p166
      %p168 = scmp.ne.s32.totalorder %s154, %s155
      %p169 = scmp.eq.s32.totalorder %s25, 5
      %p170 = por %p168, %p169
      %p172 = scmp.ne.s32.totalorder %s155, %s171
      %p173 = scmp.eq.s32.totalorder %s25, 0
      %p174 = por %p172, %p173
      %p175 = scmp.le.s32.totalorder 1, %s19
      %p176 = scmp.lt.s32.totalorder %s19, 7
      %p177 = pnand %p175, %p176
      %p178 = pneg %p177
      // Predicated region
      $region9: #{tpu_custom_call.1} parent=5 // pred_check
        _
      $region10: #{tpu_custom_call.1} parent=5 // pred_check_branch
        %180 = sbr.rel (%p177) target = $region12
      $region11: #{tpu_custom_call.1} parent=5 // pred_region
        %s181 = ssub.s32 %s19, 1
        // Predicated region
        $region13: #{tpu_custom_call.1} parent=11 // pred_check
          %p182 = pneg %p78
        $region14: #{tpu_custom_call.1} parent=11 // pred_check_branch
          %184 = sbr.rel (%p182) target = $region16
        $region15: #{tpu_custom_call.1} parent=11 // pred_region
          %186 = vsyncadd [#allocation6], 0
          %s187 = sshll.u32 %s1, 4
          %s188 = int_to_ptr.hbm [resolvable:$true] %s187
          %s189 = sshll.u32 [#allocation5], 4
          %s190 = int_to_ptr.vmem [resolvable:$true] %s189
          %195 = dma.hbm_to_vmem [thread:$0]  %s188, 73728, %s190, [#allocation6], 512, 512, 32
        $region16: #{tpu_custom_call.1} parent=11 // pred_fallthru
          _
        // Predicated region
        $region17: #{tpu_custom_call.1} parent=11 // pred_check
          %p196 = pneg %p99
        $region18: #{tpu_custom_call.1} parent=11 // pred_check_branch
          %198 = sbr.rel (%p196) target = $region20
        $region19: #{tpu_custom_call.1} parent=11 // pred_region
          %200 = vsyncadd [#allocation6], 0
          %s201 = sshll.u32 %s2, 4
          %s202 = int_to_ptr.hbm [resolvable:$true] %s201
          %s203 = sshll.u32 [#allocation7], 4
          %s204 = int_to_ptr.vmem [resolvable:$true] %s203
          %209 = dma.hbm_to_vmem [thread:$0]  %s202, 192, %s204, [#allocation6], 64, 64, 4
        $region20: #{tpu_custom_call.1} parent=11 // pred_fallthru
          _
        // Predicated region
        $region21: #{tpu_custom_call.1} parent=11 // pred_check
          %p210 = pneg %p120
        $region22: #{tpu_custom_call.1} parent=11 // pred_check_branch
          %212 = sbr.rel (%p210) target = $region24
        $region23: #{tpu_custom_call.1} parent=11 // pred_region
          %214 = vsyncadd [#allocation9], 0
          %s215 = sshll.u32 %s3, 4
          %s216 = int_to_ptr.hbm [resolvable:$true] %s215
          %s217 = sshll.u32 [#allocation8], 4
          %s218 = int_to_ptr.vmem [resolvable:$true] %s217
          %223 = dma.hbm_to_vmem [thread:$0]  %s216, 73728, %s218, [#allocation9], 384, 384, 24
        $region24: #{tpu_custom_call.1} parent=11 // pred_fallthru
          _
        // Predicated region
        $region25: #{tpu_custom_call.1} parent=11 // pred_check
          %p224 = pneg %p141
        $region26: #{tpu_custom_call.1} parent=11 // pred_check_branch
          %226 = sbr.rel (%p224) target = $region28
        $region27: #{tpu_custom_call.1} parent=11 // pred_region
          %228 = vsyncadd [#allocation9], 0
          %s230 = sshll.u32 %s4, 4
          %s231 = int_to_ptr.hbm [resolvable:$true] %s230
          %s232 = sshll.u32 [#allocation10], 4
          %s233 = int_to_ptr.vmem [resolvable:$true] %s232
          %235 = dma.hbm_to_vmem [thread:$0]  %s231, 48, %s233, [#allocation9]
        $region28: #{tpu_custom_call.1} parent=11 // pred_fallthru
          _
      $region12: #{tpu_custom_call.1} parent=5 // pred_fallthru
        _
      %p236 = scmp.lt.s32.totalorder %s19, 6
      // Predicated region
      $region29: #{tpu_custom_call.1} parent=5 // pred_check
        %p237 = pneg %p236
      $region30: #{tpu_custom_call.1} parent=5 // pred_check_branch
        %239 = sbr.rel (%p237) target = $region32
      $region31: #{tpu_custom_call.1} parent=5 // pred_region
        // Predicated region
        $region33: #{tpu_custom_call.1} parent=31 // pred_check
          %p240 = pneg %p51
        $region34: #{tpu_custom_call.1} parent=31 // pred_check_branch
          %242 = sbr.rel (%p240) target = $region36
        $region35: #{tpu_custom_call.1} parent=31 // pred_region
          %s243 = sand.u32 %s41, 1
          %s244 = scalar_lea.sflag [#allocation3], %s243
          %s245 = sand.u32 %s41, 1
          %s246 = smul.addr %s245, 24
          %s247 = scalar_lea.vmem [#allocation2], %s246
          %249 = vsyncadd %s244, 0
          %s250 = smul.addr %s26, 3
          %s251 = smul.addr %s250, 8
          %s252 = scalar_lea.hbm %s0, %s251
          %s254 = sshll.u32 %s252, 4
          %s255 = int_to_ptr.hbm [resolvable:$true] %s254
          %s256 = sshll.u32 %s247, 4
          %s257 = int_to_ptr.vmem [resolvable:$true] %s256
          %259 = dma.hbm_to_vmem [thread:$0]  %s255, 384, %s257, %s244
        $region36: #{tpu_custom_call.1} parent=31 // pred_fallthru
          _
      $region32: #{tpu_custom_call.1} parent=5 // pred_fallthru
        _
      %p260 = scmp.le.s32.totalorder 1, %s19
      %p261 = scmp.lt.s32.totalorder %s19, 7
      %p262 = pnand %p260, %p261
      %p263 = pneg %p262
      // Predicated region
      $region37: #{tpu_custom_call.1} parent=5 // pred_check
        _
      $region38: #{tpu_custom_call.1} parent=5 // pred_check_branch
        %265 = sbr.rel (%p262) target = $region40
      $region39: #{tpu_custom_call.1} parent=5 // pred_region
        %s266 = ssub.s32 %s19, 1
        %s267 = sand.u32 %s44, 1
        %s268 = scalar_lea.sflag [#allocation3], %s267
        %s269 = sand.u32 %s44, 1
        %s270 = smul.addr %s269, 24
        %s271 = scalar_lea.vmem [#allocation2], %s270
        // Predicated region
        $region41: #{tpu_custom_call.1} parent=39 // pred_check
          %p272 = pneg %p57
        $region42: #{tpu_custom_call.1} parent=39 // pred_check_branch
          %274 = sbr.rel (%p272) target = $region44
        $region43: #{tpu_custom_call.1} parent=39 // pred_region
          %276 = dma.done %s268, 384
        $region44: #{tpu_custom_call.1} parent=39 // pred_fallthru
          _
        // Predicated region
        $region45: #{tpu_custom_call.1} parent=39 // pred_check
          %p277 = pneg %p78
        $region46: #{tpu_custom_call.1} parent=39 // pred_check_branch
          %279 = sbr.rel (%p277) target = $region48
        $region47: #{tpu_custom_call.1} parent=39 // pred_region
          %281 = dma.done [#allocation6], 73728
        $region48: #{tpu_custom_call.1} parent=39 // pred_fallthru
          _
        // Predicated region
        $region49: #{tpu_custom_call.1} parent=39 // pred_check
          %p282 = pneg %p99
        $region50: #{tpu_custom_call.1} parent=39 // pred_check_branch
          %284 = sbr.rel (%p282) target = $region52
        $region51: #{tpu_custom_call.1} parent=39 // pred_region
          %286 = dma.done [#allocation6], 192
        $region52: #{tpu_custom_call.1} parent=39 // pred_fallthru
          _
        // Predicated region
        $region53: #{tpu_custom_call.1} parent=39 // pred_check
          %p287 = pneg %p120
        $region54: #{tpu_custom_call.1} parent=39 // pred_check_branch
          %289 = sbr.rel (%p287) target = $region56
        $region55: #{tpu_custom_call.1} parent=39 // pred_region
          %291 = dma.done [#allocation9], 73728
        $region56: #{tpu_custom_call.1} parent=39 // pred_fallthru
          _
        // Predicated region
        $region57: #{tpu_custom_call.1} parent=39 // pred_check
          %p292 = pneg %p141
        $region58: #{tpu_custom_call.1} parent=39 // pred_check_branch
          %294 = sbr.rel (%p292) target = $region60
        $region59: #{tpu_custom_call.1} parent=39 // pred_region
          %296 = dma.done [#allocation9], 48
        $region60: #{tpu_custom_call.1} parent=39 // pred_fallthru
          _
        %s297 = sand.u32 %s44, 1
        %s298 = scalar_lea.sflag [#allocation3], %s297
        %s299 = sand.u32 %s44, 1
        %s300 = smul.addr %s299, 24
        %s301 = scalar_lea.vmem [#allocation2], %s300
        %p302 = pneg %p57
        %p303 = pneg %p54
        %p304 = pneg %p78
        %p305 = pneg %p75
        %p306 = pneg %p99
        %p307 = pneg %p96
        %p308 = pneg %p120
        %p309 = pneg %p117
        %p310 = pneg %p141
        %p311 = pneg %p138
        %p312 = pneg %p167
        %p313 = pneg %p164
        %s314 = sand.u32 %s154, 1
        %s315 = scalar_lea.sflag [#allocation4], %s314
        %s316 = sand.u32 %s154, 1
        %s317 = smul.addr %s316, 24
        %s318 = scalar_lea.vmem [#allocation11], %s317
        %s319 = smul.u32 %s29, 192
        %s320 = smul.addr %s319, 8
        %s321 = scalar_lea.vmem [#allocation5], %s320
        %v322 = vld [vmem:[%s321] sm:$0xff]
        %v323 = vld [vmem:[%s321 + $0x8] sm:$0xff]
        %v324 = vld [vmem:[%s321 + $0x10] sm:$0xff]
        %v325 = vld [vmem:[%s321 + $0x18] sm:$0xff]
        %v326 = vld [vmem:[%s321 + $0x20] sm:$0xff]
        %v327 = vld [vmem:[%s321 + $0x28] sm:$0xff]
        %v328 = vld [vmem:[%s321 + $0x30] sm:$0xff]
        %v329 = vld [vmem:[%s321 + $0x38] sm:$0xff]
        %v330 = vld [vmem:[%s321 + $0x40] sm:$0xff]
        %v331 = vld [vmem:[%s321 + $0x48] sm:$0xff]
        %v332 = vld [vmem:[%s321 + $0x50] sm:$0xff]
        %v333 = vld [vmem:[%s321 + $0x58] sm:$0xff]
        %v334 = vld [vmem:[%s321 + $0x60] sm:$0xff]
        %v335 = vld [vmem:[%s321 + $0x68] sm:$0xff]
        %v336 = vld [vmem:[%s321 + $0x70] sm:$0xff]
        %v337 = vld [vmem:[%s321 + $0x78] sm:$0xff]
        %v338 = vld [vmem:[%s321 + $0x80] sm:$0xff]
        %v339 = vld [vmem:[%s321 + $0x88] sm:$0xff]
        %v340 = vld [vmem:[%s321 + $0x90] sm:$0xff]
        %v341 = vld [vmem:[%s321 + $0x98] sm:$0xff]
        %v342 = vld [vmem:[%s321 + $0xa0] sm:$0xff]
        %v343 = vld [vmem:[%s321 + $0xa8] sm:$0xff]
        %v344 = vld [vmem:[%s321 + $0xb0] sm:$0xff]
        %v345 = vld [vmem:[%s321 + $0xb8] sm:$0xff]
        %v346 = vld [vmem:[%s321 + $0xc0] sm:$0xff]
        %v347 = vld [vmem:[%s321 + $0xc8] sm:$0xff]
        %v348 = vld [vmem:[%s321 + $0xd0] sm:$0xff]
        %v349 = vld [vmem:[%s321 + $0xd8] sm:$0xff]
        %v350 = vld [vmem:[%s321 + $0xe0] sm:$0xff]
        %v351 = vld [vmem:[%s321 + $0xe8] sm:$0xff]
        %v352 = vld [vmem:[%s321 + $0xf0] sm:$0xff]
        %v353 = vld [vmem:[%s321 + $0xf8] sm:$0xff]
        %v354 = vld [vmem:[%s321 + $0x100] sm:$0xff]
        %v355 = vld [vmem:[%s321 + $0x108] sm:$0xff]
        %v356 = vld [vmem:[%s321 + $0x110] sm:$0xff]
        %v357 = vld [vmem:[%s321 + $0x118] sm:$0xff]
        %v358 = vld [vmem:[%s321 + $0x120] sm:$0xff]
        %v359 = vld [vmem:[%s321 + $0x128] sm:$0xff]
        %v360 = vld [vmem:[%s321 + $0x130] sm:$0xff]
        %v361 = vld [vmem:[%s321 + $0x138] sm:$0xff]
        %v362 = vld [vmem:[%s321 + $0x140] sm:$0xff]
        %v363 = vld [vmem:[%s321 + $0x148] sm:$0xff]
        %v364 = vld [vmem:[%s321 + $0x150] sm:$0xff]
        %v365 = vld [vmem:[%s321 + $0x158] sm:$0xff]
        %v366 = vld [vmem:[%s321 + $0x160] sm:$0xff]
        %v367 = vld [vmem:[%s321 + $0x168] sm:$0xff]
        %v368 = vld [vmem:[%s321 + $0x170] sm:$0xff]
        %v369 = vld [vmem:[%s321 + $0x178] sm:$0xff]
        %v370 = vld [vmem:[%s321 + $0x180] sm:$0xff]
        %v371 = vld [vmem:[%s321 + $0x188] sm:$0xff]
        %v372 = vld [vmem:[%s321 + $0x190] sm:$0xff]
        %v373 = vld [vmem:[%s321 + $0x198] sm:$0xff]
        %v374 = vld [vmem:[%s321 + $0x1a0] sm:$0xff]
        %v375 = vld [vmem:[%s321 + $0x1a8] sm:$0xff]
        %v376 = vld [vmem:[%s321 + $0x1b0] sm:$0xff]
        %v377 = vld [vmem:[%s321 + $0x1b8] sm:$0xff]
        %v378 = vld [vmem:[%s321 + $0x1c0] sm:$0xff]
        %v379 = vld [vmem:[%s321 + $0x1c8] sm:$0xff]
        %v380 = vld [vmem:[%s321 + $0x1d0] sm:$0xff]
        %v381 = vld [vmem:[%s321 + $0x1d8] sm:$0xff]
        %v382 = vld [vmem:[%s321 + $0x1e0] sm:$0xff]
        %v383 = vld [vmem:[%s321 + $0x1e8] sm:$0xff]
        %v384 = vld [vmem:[%s321 + $0x1f0] sm:$0xff]
        %v385 = vld [vmem:[%s321 + $0x1f8] sm:$0xff]
        %v386 = vld [vmem:[%s321 + $0x200] sm:$0xff]
        %v387 = vld [vmem:[%s321 + $0x208] sm:$0xff]
        %v388 = vld [vmem:[%s321 + $0x210] sm:$0xff]
        %v389 = vld [vmem:[%s321 + $0x218] sm:$0xff]
        %v390 = vld [vmem:[%s321 + $0x220] sm:$0xff]
        %v391 = vld [vmem:[%s321 + $0x228] sm:$0xff]
        %v392 = vld [vmem:[%s321 + $0x230] sm:$0xff]
        %v393 = vld [vmem:[%s321 + $0x238] sm:$0xff]
        %v394 = vld [vmem:[%s321 + $0x240] sm:$0xff]
        %v395 = vld [vmem:[%s321 + $0x248] sm:$0xff]
        %v396 = vld [vmem:[%s321 + $0x250] sm:$0xff]
        %v397 = vld [vmem:[%s321 + $0x258] sm:$0xff]
        %v398 = vld [vmem:[%s321 + $0x260] sm:$0xff]
        %v399 = vld [vmem:[%s321 + $0x268] sm:$0xff]
        %v400 = vld [vmem:[%s321 + $0x270] sm:$0xff]
        %v401 = vld [vmem:[%s321 + $0x278] sm:$0xff]
        %v402 = vld [vmem:[%s321 + $0x280] sm:$0xff]
        %v403 = vld [vmem:[%s321 + $0x288] sm:$0xff]
        %v404 = vld [vmem:[%s321 + $0x290] sm:$0xff]
        %v405 = vld [vmem:[%s321 + $0x298] sm:$0xff]
        %v406 = vld [vmem:[%s321 + $0x2a0] sm:$0xff]
        %v407 = vld [vmem:[%s321 + $0x2a8] sm:$0xff]
        %v408 = vld [vmem:[%s321 + $0x2b0] sm:$0xff]
        %v409 = vld [vmem:[%s321 + $0x2b8] sm:$0xff]
        %v410 = vld [vmem:[%s321 + $0x2c0] sm:$0xff]
        %v411 = vld [vmem:[%s321 + $0x2c8] sm:$0xff]
        %v412 = vld [vmem:[%s321 + $0x2d0] sm:$0xff]
        %v413 = vld [vmem:[%s321 + $0x2d8] sm:$0xff]
        %v414 = vld [vmem:[%s321 + $0x2e0] sm:$0xff]
        %v415 = vld [vmem:[%s321 + $0x2e8] sm:$0xff]
        %v416 = vld [vmem:[%s321 + $0x2f0] sm:$0xff]
        %v417 = vld [vmem:[%s321 + $0x2f8] sm:$0xff]
        %v418 = vld [vmem:[%s321 + $0x300] sm:$0xff]
        %v419 = vld [vmem:[%s321 + $0x308] sm:$0xff]
        %v420 = vld [vmem:[%s321 + $0x310] sm:$0xff]
        %v421 = vld [vmem:[%s321 + $0x318] sm:$0xff]
        %v422 = vld [vmem:[%s321 + $0x320] sm:$0xff]
        %v423 = vld [vmem:[%s321 + $0x328] sm:$0xff]
        %v424 = vld [vmem:[%s321 + $0x330] sm:$0xff]
        %v425 = vld [vmem:[%s321 + $0x338] sm:$0xff]
        %v426 = vld [vmem:[%s321 + $0x340] sm:$0xff]
        %v427 = vld [vmem:[%s321 + $0x348] sm:$0xff]
        %v428 = vld [vmem:[%s321 + $0x350] sm:$0xff]
        %v429 = vld [vmem:[%s321 + $0x358] sm:$0xff]
        %v430 = vld [vmem:[%s321 + $0x360] sm:$0xff]
        %v431 = vld [vmem:[%s321 + $0x368] sm:$0xff]
        %v432 = vld [vmem:[%s321 + $0x370] sm:$0xff]
        %v433 = vld [vmem:[%s321 + $0x378] sm:$0xff]
        %v434 = vld [vmem:[%s321 + $0x380] sm:$0xff]
        %v435 = vld [vmem:[%s321 + $0x388] sm:$0xff]
        %v436 = vld [vmem:[%s321 + $0x390] sm:$0xff]
        %v437 = vld [vmem:[%s321 + $0x398] sm:$0xff]
        %v438 = vld [vmem:[%s321 + $0x3a0] sm:$0xff]
        %v439 = vld [vmem:[%s321 + $0x3a8] sm:$0xff]
        %v440 = vld [vmem:[%s321 + $0x3b0] sm:$0xff]
        %v441 = vld [vmem:[%s321 + $0x3b8] sm:$0xff]
        %v442 = vld [vmem:[%s321 + $0x3c0] sm:$0xff]
        %v443 = vld [vmem:[%s321 + $0x3c8] sm:$0xff]
        %v444 = vld [vmem:[%s321 + $0x3d0] sm:$0xff]
        %v445 = vld [vmem:[%s321 + $0x3d8] sm:$0xff]
        %v446 = vld [vmem:[%s321 + $0x3e0] sm:$0xff]
        %v447 = vld [vmem:[%s321 + $0x3e8] sm:$0xff]
        %v448 = vld [vmem:[%s321 + $0x3f0] sm:$0xff]
        %v449 = vld [vmem:[%s321 + $0x3f8] sm:$0xff]
        %v450 = vld [vmem:[%s321 + $0x400] sm:$0xff]
        %v451 = vld [vmem:[%s321 + $0x408] sm:$0xff]
        %v452 = vld [vmem:[%s321 + $0x410] sm:$0xff]
        %v453 = vld [vmem:[%s321 + $0x418] sm:$0xff]
        %v454 = vld [vmem:[%s321 + $0x420] sm:$0xff]
        %v455 = vld [vmem:[%s321 + $0x428] sm:$0xff]
        %v456 = vld [vmem:[%s321 + $0x430] sm:$0xff]
        %v457 = vld [vmem:[%s321 + $0x438] sm:$0xff]
        %v458 = vld [vmem:[%s321 + $0x440] sm:$0xff]
        %v459 = vld [vmem:[%s321 + $0x448] sm:$0xff]
        %v460 = vld [vmem:[%s321 + $0x450] sm:$0xff]
        %v461 = vld [vmem:[%s321 + $0x458] sm:$0xff]
        %v462 = vld [vmem:[%s321 + $0x460] sm:$0xff]
        %v463 = vld [vmem:[%s321 + $0x468] sm:$0xff]
        %v464 = vld [vmem:[%s321 + $0x470] sm:$0xff]
        %v465 = vld [vmem:[%s321 + $0x478] sm:$0xff]
        %v466 = vld [vmem:[%s321 + $0x480] sm:$0xff]
        %v467 = vld [vmem:[%s321 + $0x488] sm:$0xff]
        %v468 = vld [vmem:[%s321 + $0x490] sm:$0xff]
        %v469 = vld [vmem:[%s321 + $0x498] sm:$0xff]
        %v470 = vld [vmem:[%s321 + $0x4a0] sm:$0xff]
        %v471 = vld [vmem:[%s321 + $0x4a8] sm:$0xff]
        %v472 = vld [vmem:[%s321 + $0x4b0] sm:$0xff]
        %v473 = vld [vmem:[%s321 + $0x4b8] sm:$0xff]
        %v474 = vld [vmem:[%s321 + $0x4c0] sm:$0xff]
        %v475 = vld [vmem:[%s321 + $0x4c8] sm:$0xff]
        %v476 = vld [vmem:[%s321 + $0x4d0] sm:$0xff]
        %v477 = vld [vmem:[%s321 + $0x4d8] sm:$0xff]
        %v478 = vld [vmem:[%s321 + $0x4e0] sm:$0xff]
        %v479 = vld [vmem:[%s321 + $0x4e8] sm:$0xff]
        %v480 = vld [vmem:[%s321 + $0x4f0] sm:$0xff]
        %v481 = vld [vmem:[%s321 + $0x4f8] sm:$0xff]
        %v482 = vld [vmem:[%s321 + $0x500] sm:$0xff]
        %v483 = vld [vmem:[%s321 + $0x508] sm:$0xff]
        %v484 = vld [vmem:[%s321 + $0x510] sm:$0xff]
        %v485 = vld [vmem:[%s321 + $0x518] sm:$0xff]
        %v486 = vld [vmem:[%s321 + $0x520] sm:$0xff]
        %v487 = vld [vmem:[%s321 + $0x528] sm:$0xff]
        %v488 = vld [vmem:[%s321 + $0x530] sm:$0xff]
        %v489 = vld [vmem:[%s321 + $0x538] sm:$0xff]
        %v490 = vld [vmem:[%s321 + $0x540] sm:$0xff]
        %v491 = vld [vmem:[%s321 + $0x548] sm:$0xff]
        %v492 = vld [vmem:[%s321 + $0x550] sm:$0xff]
        %v493 = vld [vmem:[%s321 + $0x558] sm:$0xff]
        %v494 = vld [vmem:[%s321 + $0x560] sm:$0xff]
        %v495 = vld [vmem:[%s321 + $0x568] sm:$0xff]
        %v496 = vld [vmem:[%s321 + $0x570] sm:$0xff]
        %v497 = vld [vmem:[%s321 + $0x578] sm:$0xff]
        %v498 = vld [vmem:[%s321 + $0x580] sm:$0xff]
        %v499 = vld [vmem:[%s321 + $0x588] sm:$0xff]
        %v500 = vld [vmem:[%s321 + $0x590] sm:$0xff]
        %v501 = vld [vmem:[%s321 + $0x598] sm:$0xff]
        %v502 = vld [vmem:[%s321 + $0x5a0] sm:$0xff]
        %v503 = vld [vmem:[%s321 + $0x5a8] sm:$0xff]
        %v504 = vld [vmem:[%s321 + $0x5b0] sm:$0xff]
        %v505 = vld [vmem:[%s321 + $0x5b8] sm:$0xff]
        %v506 = vld [vmem:[%s321 + $0x5c0] sm:$0xff]
        %v507 = vld [vmem:[%s321 + $0x5c8] sm:$0xff]
        %v508 = vld [vmem:[%s321 + $0x5d0] sm:$0xff]
        %v509 = vld [vmem:[%s321 + $0x5d8] sm:$0xff]
        %v510 = vld [vmem:[%s321 + $0x5e0] sm:$0xff]
        %v511 = vld [vmem:[%s321 + $0x5e8] sm:$0xff]
        %v512 = vld [vmem:[%s321 + $0x5f0] sm:$0xff]
        %v513 = vld [vmem:[%s321 + $0x5f8] sm:$0xff]
        %s514 = smul.u32 %s29, 4
        %s515 = scalar_lea.vmem [#allocation7], %s514
        %v516 = vld [vmem:[%s515] sm:$0xf]
        %s517 = smul.addr %s319, 8
        %s518 = scalar_lea.vmem [#allocation8], %s517
        %v519 = vld [vmem:[%s518] sm:$0xff]
        %v520 = vld [vmem:[%s518 + $0x8] sm:$0xff]
        %v521 = vld [vmem:[%s518 + $0x10] sm:$0xff]
        %v522 = vld [vmem:[%s518 + $0x18] sm:$0xff]
        %v523 = vld [vmem:[%s518 + $0x20] sm:$0xff]
        %v524 = vld [vmem:[%s518 + $0x28] sm:$0xff]
        %v525 = vld [vmem:[%s518 + $0x30] sm:$0xff]
        %v526 = vld [vmem:[%s518 + $0x38] sm:$0xff]
        %v527 = vld [vmem:[%s518 + $0x40] sm:$0xff]
        %v528 = vld [vmem:[%s518 + $0x48] sm:$0xff]
        %v529 = vld [vmem:[%s518 + $0x50] sm:$0xff]
        %v530 = vld [vmem:[%s518 + $0x58] sm:$0xff]
        %v531 = vld [vmem:[%s518 + $0x60] sm:$0xff]
        %v532 = vld [vmem:[%s518 + $0x68] sm:$0xff]
        %v533 = vld [vmem:[%s518 + $0x70] sm:$0xff]
        %v534 = vld [vmem:[%s518 + $0x78] sm:$0xff]
        %v535 = vld [vmem:[%s518 + $0x80] sm:$0xff]
        %v536 = vld [vmem:[%s518 + $0x88] sm:$0xff]
        %v537 = vld [vmem:[%s518 + $0x90] sm:$0xff]
        %v538 = vld [vmem:[%s518 + $0x98] sm:$0xff]
        %v539 = vld [vmem:[%s518 + $0xa0] sm:$0xff]
        %v540 = vld [vmem:[%s518 + $0xa8] sm:$0xff]
        %v541 = vld [vmem:[%s518 + $0xb0] sm:$0xff]
        %v542 = vld [vmem:[%s518 + $0xb8] sm:$0xff]
        %v543 = vld [vmem:[%s518 + $0xc0] sm:$0xff]
        %v544 = vld [vmem:[%s518 + $0xc8] sm:$0xff]
        %v545 = vld [vmem:[%s518 + $0xd0] sm:$0xff]
        %v546 = vld [vmem:[%s518 + $0xd8] sm:$0xff]
        %v547 = vld [vmem:[%s518 + $0xe0] sm:$0xff]
        %v548 = vld [vmem:[%s518 + $0xe8] sm:$0xff]
        %v549 = vld [vmem:[%s518 + $0xf0] sm:$0xff]
        %v550 = vld [vmem:[%s518 + $0xf8] sm:$0xff]
        %v551 = vld [vmem:[%s518 + $0x100] sm:$0xff]
        %v552 = vld [vmem:[%s518 + $0x108] sm:$0xff]
        %v553 = vld [vmem:[%s518 + $0x110] sm:$0xff]
        %v554 = vld [vmem:[%s518 + $0x118] sm:$0xff]
        %v555 = vld [vmem:[%s518 + $0x120] sm:$0xff]
        %v556 = vld [vmem:[%s518 + $0x128] sm:$0xff]
        %v557 = vld [vmem:[%s518 + $0x130] sm:$0xff]
        %v558 = vld [vmem:[%s518 + $0x138] sm:$0xff]
        %v559 = vld [vmem:[%s518 + $0x140] sm:$0xff]
        %v560 = vld [vmem:[%s518 + $0x148] sm:$0xff]
        %v561 = vld [vmem:[%s518 + $0x150] sm:$0xff]
        %v562 = vld [vmem:[%s518 + $0x158] sm:$0xff]
        %v563 = vld [vmem:[%s518 + $0x160] sm:$0xff]
        %v564 = vld [vmem:[%s518 + $0x168] sm:$0xff]
        %v565 = vld [vmem:[%s518 + $0x170] sm:$0xff]
        %v566 = vld [vmem:[%s518 + $0x178] sm:$0xff]
        %v567 = vld [vmem:[%s518 + $0x180] sm:$0xff]
        %v568 = vld [vmem:[%s518 + $0x188] sm:$0xff]
        %v569 = vld [vmem:[%s518 + $0x190] sm:$0xff]
        %v570 = vld [vmem:[%s518 + $0x198] sm:$0xff]
        %v571 = vld [vmem:[%s518 + $0x1a0] sm:$0xff]
        %v572 = vld [vmem:[%s518 + $0x1a8] sm:$0xff]
        %v573 = vld [vmem:[%s518 + $0x1b0] sm:$0xff]
        %v574 = vld [vmem:[%s518 + $0x1b8] sm:$0xff]
        %v575 = vld [vmem:[%s518 + $0x1c0] sm:$0xff]
        %v576 = vld [vmem:[%s518 + $0x1c8] sm:$0xff]
        %v577 = vld [vmem:[%s518 + $0x1d0] sm:$0xff]
        %v578 = vld [vmem:[%s518 + $0x1d8] sm:$0xff]
        %v579 = vld [vmem:[%s518 + $0x1e0] sm:$0xff]
        %v580 = vld [vmem:[%s518 + $0x1e8] sm:$0xff]
        %v581 = vld [vmem:[%s518 + $0x1f0] sm:$0xff]
        %v582 = vld [vmem:[%s518 + $0x1f8] sm:$0xff]
        %v583 = vld [vmem:[%s518 + $0x200] sm:$0xff]
        %v584 = vld [vmem:[%s518 + $0x208] sm:$0xff]
        %v585 = vld [vmem:[%s518 + $0x210] sm:$0xff]
        %v586 = vld [vmem:[%s518 + $0x218] sm:$0xff]
        %v587 = vld [vmem:[%s518 + $0x220] sm:$0xff]
        %v588 = vld [vmem:[%s518 + $0x228] sm:$0xff]
        %v589 = vld [vmem:[%s518 + $0x230] sm:$0xff]
        %v590 = vld [vmem:[%s518 + $0x238] sm:$0xff]
        %v591 = vld [vmem:[%s518 + $0x240] sm:$0xff]
        %v592 = vld [vmem:[%s518 + $0x248] sm:$0xff]
        %v593 = vld [vmem:[%s518 + $0x250] sm:$0xff]
        %v594 = vld [vmem:[%s518 + $0x258] sm:$0xff]
        %v595 = vld [vmem:[%s518 + $0x260] sm:$0xff]
        %v596 = vld [vmem:[%s518 + $0x268] sm:$0xff]
        %v597 = vld [vmem:[%s518 + $0x270] sm:$0xff]
        %v598 = vld [vmem:[%s518 + $0x278] sm:$0xff]
        %v599 = vld [vmem:[%s518 + $0x280] sm:$0xff]
        %v600 = vld [vmem:[%s518 + $0x288] sm:$0xff]
        %v601 = vld [vmem:[%s518 + $0x290] sm:$0xff]
        %v602 = vld [vmem:[%s518 + $0x298] sm:$0xff]
        %v603 = vld [vmem:[%s518 + $0x2a0] sm:$0xff]
        %v604 = vld [vmem:[%s518 + $0x2a8] sm:$0xff]
        %v605 = vld [vmem:[%s518 + $0x2b0] sm:$0xff]
        %v606 = vld [vmem:[%s518 + $0x2b8] sm:$0xff]
        %v607 = vld [vmem:[%s518 + $0x2c0] sm:$0xff]
        %v608 = vld [vmem:[%s518 + $0x2c8] sm:$0xff]
        %v609 = vld [vmem:[%s518 + $0x2d0] sm:$0xff]
        %v610 = vld [vmem:[%s518 + $0x2d8] sm:$0xff]
        %v611 = vld [vmem:[%s518 + $0x2e0] sm:$0xff]
        %v612 = vld [vmem:[%s518 + $0x2e8] sm:$0xff]
        %v613 = vld [vmem:[%s518 + $0x2f0] sm:$0xff]
        %v614 = vld [vmem:[%s518 + $0x2f8] sm:$0xff]
        %v615 = vld [vmem:[%s518 + $0x300] sm:$0xff]
        %v616 = vld [vmem:[%s518 + $0x308] sm:$0xff]
        %v617 = vld [vmem:[%s518 + $0x310] sm:$0xff]
        %v618 = vld [vmem:[%s518 + $0x318] sm:$0xff]
        %v619 = vld [vmem:[%s518 + $0x320] sm:$0xff]
        %v620 = vld [vmem:[%s518 + $0x328] sm:$0xff]
        %v621 = vld [vmem:[%s518 + $0x330] sm:$0xff]
        %v622 = vld [vmem:[%s518 + $0x338] sm:$0xff]
        %v623 = vld [vmem:[%s518 + $0x340] sm:$0xff]
        %v624 = vld [vmem:[%s518 + $0x348] sm:$0xff]
        %v625 = vld [vmem:[%s518 + $0x350] sm:$0xff]
        %v626 = vld [vmem:[%s518 + $0x358] sm:$0xff]
        %v627 = vld [vmem:[%s518 + $0x360] sm:$0xff]
        %v628 = vld [vmem:[%s518 + $0x368] sm:$0xff]
        %v629 = vld [vmem:[%s518 + $0x370] sm:$0xff]
        %v630 = vld [vmem:[%s518 + $0x378] sm:$0xff]
        %v631 = vld [vmem:[%s518 + $0x380] sm:$0xff]
        %v632 = vld [vmem:[%s518 + $0x388] sm:$0xff]
        %v633 = vld [vmem:[%s518 + $0x390] sm:$0xff]
        %v634 = vld [vmem:[%s518 + $0x398] sm:$0xff]
        %v635 = vld [vmem:[%s518 + $0x3a0] sm:$0xff]
        %v636 = vld [vmem:[%s518 + $0x3a8] sm:$0xff]
        %v637 = vld [vmem:[%s518 + $0x3b0] sm:$0xff]
        %v638 = vld [vmem:[%s518 + $0x3b8] sm:$0xff]
        %v639 = vld [vmem:[%s518 + $0x3c0] sm:$0xff]
        %v640 = vld [vmem:[%s518 + $0x3c8] sm:$0xff]
        %v641 = vld [vmem:[%s518 + $0x3d0] sm:$0xff]
        %v642 = vld [vmem:[%s518 + $0x3d8] sm:$0xff]
        %v643 = vld [vmem:[%s518 + $0x3e0] sm:$0xff]
        %v644 = vld [vmem:[%s518 + $0x3e8] sm:$0xff]
        %v645 = vld [vmem:[%s518 + $0x3f0] sm:$0xff]
        %v646 = vld [vmem:[%s518 + $0x3f8] sm:$0xff]
        %v647 = vld [vmem:[%s518 + $0x400] sm:$0xff]
        %v648 = vld [vmem:[%s518 + $0x408] sm:$0xff]
        %v649 = vld [vmem:[%s518 + $0x410] sm:$0xff]
        %v650 = vld [vmem:[%s518 + $0x418] sm:$0xff]
        %v651 = vld [vmem:[%s518 + $0x420] sm:$0xff]
        %v652 = vld [vmem:[%s518 + $0x428] sm:$0xff]
        %v653 = vld [vmem:[%s518 + $0x430] sm:$0xff]
        %v654 = vld [vmem:[%s518 + $0x438] sm:$0xff]
        %v655 = vld [vmem:[%s518 + $0x440] sm:$0xff]
        %v656 = vld [vmem:[%s518 + $0x448] sm:$0xff]
        %v657 = vld [vmem:[%s518 + $0x450] sm:$0xff]
        %v658 = vld [vmem:[%s518 + $0x458] sm:$0xff]
        %v659 = vld [vmem:[%s518 + $0x460] sm:$0xff]
        %v660 = vld [vmem:[%s518 + $0x468] sm:$0xff]
        %v661 = vld [vmem:[%s518 + $0x470] sm:$0xff]
        %v662 = vld [vmem:[%s518 + $0x478] sm:$0xff]
        %v663 = vld [vmem:[%s518 + $0x480] sm:$0xff]
        %v664 = vld [vmem:[%s518 + $0x488] sm:$0xff]
        %v665 = vld [vmem:[%s518 + $0x490] sm:$0xff]
        %v666 = vld [vmem:[%s518 + $0x498] sm:$0xff]
        %v667 = vld [vmem:[%s518 + $0x4a0] sm:$0xff]
        %v668 = vld [vmem:[%s518 + $0x4a8] sm:$0xff]
        %v669 = vld [vmem:[%s518 + $0x4b0] sm:$0xff]
        %v670 = vld [vmem:[%s518 + $0x4b8] sm:$0xff]
        %v671 = vld [vmem:[%s518 + $0x4c0] sm:$0xff]
        %v672 = vld [vmem:[%s518 + $0x4c8] sm:$0xff]
        %v673 = vld [vmem:[%s518 + $0x4d0] sm:$0xff]
        %v674 = vld [vmem:[%s518 + $0x4d8] sm:$0xff]
        %v675 = vld [vmem:[%s518 + $0x4e0] sm:$0xff]
        %v676 = vld [vmem:[%s518 + $0x4e8] sm:$0xff]
        %v677 = vld [vmem:[%s518 + $0x4f0] sm:$0xff]
        %v678 = vld [vmem:[%s518 + $0x4f8] sm:$0xff]
        %v679 = vld [vmem:[%s518 + $0x500] sm:$0xff]
        %v680 = vld [vmem:[%s518 + $0x508] sm:$0xff]
        %v681 = vld [vmem:[%s518 + $0x510] sm:$0xff]
        %v682 = vld [vmem:[%s518 + $0x518] sm:$0xff]
        %v683 = vld [vmem:[%s518 + $0x520] sm:$0xff]
        %v684 = vld [vmem:[%s518 + $0x528] sm:$0xff]
        %v685 = vld [vmem:[%s518 + $0x530] sm:$0xff]
        %v686 = vld [vmem:[%s518 + $0x538] sm:$0xff]
        %v687 = vld [vmem:[%s518 + $0x540] sm:$0xff]
        %v688 = vld [vmem:[%s518 + $0x548] sm:$0xff]
        %v689 = vld [vmem:[%s518 + $0x550] sm:$0xff]
        %v690 = vld [vmem:[%s518 + $0x558] sm:$0xff]
        %v691 = vld [vmem:[%s518 + $0x560] sm:$0xff]
        %v692 = vld [vmem:[%s518 + $0x568] sm:$0xff]
        %v693 = vld [vmem:[%s518 + $0x570] sm:$0xff]
        %v694 = vld [vmem:[%s518 + $0x578] sm:$0xff]
        %v695 = vld [vmem:[%s518 + $0x580] sm:$0xff]
        %v696 = vld [vmem:[%s518 + $0x588] sm:$0xff]
        %v697 = vld [vmem:[%s518 + $0x590] sm:$0xff]
        %v698 = vld [vmem:[%s518 + $0x598] sm:$0xff]
        %v699 = vld [vmem:[%s518 + $0x5a0] sm:$0xff]
        %v700 = vld [vmem:[%s518 + $0x5a8] sm:$0xff]
        %v701 = vld [vmem:[%s518 + $0x5b0] sm:$0xff]
        %v702 = vld [vmem:[%s518 + $0x5b8] sm:$0xff]
        %v703 = vld [vmem:[%s518 + $0x5c0] sm:$0xff]
        %v704 = vld [vmem:[%s518 + $0x5c8] sm:$0xff]
        %v705 = vld [vmem:[%s518 + $0x5d0] sm:$0xff]
        %v706 = vld [vmem:[%s518 + $0x5d8] sm:$0xff]
        %v707 = vld [vmem:[%s518 + $0x5e0] sm:$0xff]
        %v708 = vld [vmem:[%s518 + $0x5e8] sm:$0xff]
        %v709 = vld [vmem:[%s518 + $0x5f0] sm:$0xff]
        %v710 = vld [vmem:[%s518 + $0x5f8] sm:$0xff]
        %v711 = vld [vmem:[%s271] sm:$0xff]
        %v712 = vld [vmem:[%s271 + $0x8] sm:$0xff]
        %v713 = vld [vmem:[%s271 + $0x10] sm:$0xff]
        %v715 = vperm.slane %v516, 0
        %v716 = vperm.slane %v516, 1
        %v717 = vperm.slane %v516, 2
        %v718 = vperm.slane %v516, 3
        %723 = vmatpush.msra.mxu0 %v382
        %724 = vmatpush.msra.mxu0 %v378
        %725 = vmatpush.msra.mxu0 %v374
        %726 = vmatpush.msra.mxu0 %v370
        %727 = vmatpush.msra.mxu0 %v366
        %728 = vmatpush.msra.mxu0 %v362
        %729 = vmatpush.msra.mxu0 %v358
        %730 = vmatpush.msra.mxu0 %v354
        %731 = vmatpush.msra.mxu0 %v350
        %732 = vmatpush.msra.mxu0 %v346
        %733 = vmatpush.msra.mxu0 %v342
        %734 = vmatpush.msra.mxu0 %v338
        %735 = vmatpush.msra.mxu0 %v334
        %736 = vmatpush.msra.mxu0 %v330
        %737 = vmatpush.msra.mxu0 %v326
        %738 = vmatpush.msra.mxu0 %v322
        %739 = vmatmul.f32.gmra.mxu0 %v711
        %v740 = vpop.f32.mrf.mxu0
        %v741 = vadd.f32 %v715, %v740
        %742 = vdwg.mxu0
        %743 = vmatpush.msra.mxu0 %v446
        %744 = vmatpush.msra.mxu0 %v442
        %745 = vmatpush.msra.mxu0 %v438
        %746 = vmatpush.msra.mxu0 %v434
        %747 = vmatpush.msra.mxu0 %v430
        %748 = vmatpush.msra.mxu0 %v426
        %749 = vmatpush.msra.mxu0 %v422
        %750 = vmatpush.msra.mxu0 %v418
        %751 = vmatpush.msra.mxu0 %v414
        %752 = vmatpush.msra.mxu0 %v410
        %753 = vmatpush.msra.mxu0 %v406
        %754 = vmatpush.msra.mxu0 %v402
        %755 = vmatpush.msra.mxu0 %v398
        %756 = vmatpush.msra.mxu0 %v394
        %757 = vmatpush.msra.mxu0 %v390
        %758 = vmatpush.msra.mxu0 %v386
        %759 = vmatmul.f32.gmra.mxu0 %v712
        %v760 = vpop.f32.mrf.mxu0
        %v761 = vadd.f32 %v741, %v760
        %762 = vdwg.mxu0
        %763 = vmatpush.msra.mxu0 %v510
        %764 = vmatpush.msra.mxu0 %v506
        %765 = vmatpush.msra.mxu0 %v502
        %766 = vmatpush.msra.mxu0 %v498
        %767 = vmatpush.msra.mxu0 %v494
        %768 = vmatpush.msra.mxu0 %v490
        %769 = vmatpush.msra.mxu0 %v486
        %770 = vmatpush.msra.mxu0 %v482
        %771 = vmatpush.msra.mxu0 %v478
        %772 = vmatpush.msra.mxu0 %v474
        %773 = vmatpush.msra.mxu0 %v470
        %774 = vmatpush.msra.mxu0 %v466
        %775 = vmatpush.msra.mxu0 %v462
        %776 = vmatpush.msra.mxu0 %v458
        %777 = vmatpush.msra.mxu0 %v454
        %778 = vmatpush.msra.mxu0 %v450
        %779 = vmatmul.f32.gmra.mxu0 %v713
        %v780 = vpop.f32.mrf.mxu0
        %v781 = vadd.f32 %v761, %v780
        %782 = vdwg.mxu0
        %783 = vmatpush.msra.mxu0 %v383
        %784 = vmatpush.msra.mxu0 %v379
        %785 = vmatpush.msra.mxu0 %v375
        %786 = vmatpush.msra.mxu0 %v371
        %787 = vmatpush.msra.mxu0 %v367
        %788 = vmatpush.msra.mxu0 %v363
        %789 = vmatpush.msra.mxu0 %v359
        %790 = vmatpush.msra.mxu0 %v355
        %791 = vmatpush.msra.mxu0 %v351
        %792 = vmatpush.msra.mxu0 %v347
        %793 = vmatpush.msra.mxu0 %v343
        %794 = vmatpush.msra.mxu0 %v339
        %795 = vmatpush.msra.mxu0 %v335
        %796 = vmatpush.msra.mxu0 %v331
        %797 = vmatpush.msra.mxu0 %v327
        %798 = vmatpush.msra.mxu0 %v323
        %799 = vmatmul.f32.gmra.mxu0 %v711
        %v800 = vpop.f32.mrf.mxu0
        %v801 = vadd.f32 %v716, %v800
        %802 = vdwg.mxu0
        %803 = vmatpush.msra.mxu0 %v447
        %804 = vmatpush.msra.mxu0 %v443
        %805 = vmatpush.msra.mxu0 %v439
        %806 = vmatpush.msra.mxu0 %v435
        %807 = vmatpush.msra.mxu0 %v431
        %808 = vmatpush.msra.mxu0 %v427
        %809 = vmatpush.msra.mxu0 %v423
        %810 = vmatpush.msra.mxu0 %v419
        %811 = vmatpush.msra.mxu0 %v415
        %812 = vmatpush.msra.mxu0 %v411
        %813 = vmatpush.msra.mxu0 %v407
        %814 = vmatpush.msra.mxu0 %v403
        %815 = vmatpush.msra.mxu0 %v399
        %816 = vmatpush.msra.mxu0 %v395
        %817 = vmatpush.msra.mxu0 %v391
        %818 = vmatpush.msra.mxu0 %v387
        %819 = vmatmul.f32.gmra.mxu0 %v712
        %v820 = vpop.f32.mrf.mxu0
        %v821 = vadd.f32 %v801, %v820
        %822 = vdwg.mxu0
        %823 = vmatpush.msra.mxu0 %v511
        %824 = vmatpush.msra.mxu0 %v507
        %825 = vmatpush.msra.mxu0 %v503
        %826 = vmatpush.msra.mxu0 %v499
        %827 = vmatpush.msra.mxu0 %v495
        %828 = vmatpush.msra.mxu0 %v491
        %829 = vmatpush.msra.mxu0 %v487
        %830 = vmatpush.msra.mxu0 %v483
        %831 = vmatpush.msra.mxu0 %v479
        %832 = vmatpush.msra.mxu0 %v475
        %833 = vmatpush.msra.mxu0 %v471
        %834 = vmatpush.msra.mxu0 %v467
        %835 = vmatpush.msra.mxu0 %v463
        %836 = vmatpush.msra.mxu0 %v459
        %837 = vmatpush.msra.mxu0 %v455
        %838 = vmatpush.msra.mxu0 %v451
        %839 = vmatmul.f32.gmra.mxu0 %v713
        %v840 = vpop.f32.mrf.mxu0
        %v841 = vadd.f32 %v821, %v840
        %842 = vdwg.mxu0
        %843 = vmatpush.msra.mxu0 %v384
        %844 = vmatpush.msra.mxu0 %v380
        %845 = vmatpush.msra.mxu0 %v376
        %846 = vmatpush.msra.mxu0 %v372
        %847 = vmatpush.msra.mxu0 %v368
        %848 = vmatpush.msra.mxu0 %v364
        %849 = vmatpush.msra.mxu0 %v360
        %850 = vmatpush.msra.mxu0 %v356
        %851 = vmatpush.msra.mxu0 %v352
        %852 = vmatpush.msra.mxu0 %v348
        %853 = vmatpush.msra.mxu0 %v344
        %854 = vmatpush.msra.mxu0 %v340
        %855 = vmatpush.msra.mxu0 %v336
        %856 = vmatpush.msra.mxu0 %v332
        %857 = vmatpush.msra.mxu0 %v328
        %858 = vmatpush.msra.mxu0 %v324
        %859 = vmatmul.f32.gmra.mxu0 %v711
        %v860 = vpop.f32.mrf.mxu0
        %v861 = vadd.f32 %v717, %v860
        %862 = vdwg.mxu0
        %863 = vmatpush.msra.mxu0 %v448
        %864 = vmatpush.msra.mxu0 %v444
        %865 = vmatpush.msra.mxu0 %v440
        %866 = vmatpush.msra.mxu0 %v436
        %867 = vmatpush.msra.mxu0 %v432
        %868 = vmatpush.msra.mxu0 %v428
        %869 = vmatpush.msra.mxu0 %v424
        %870 = vmatpush.msra.mxu0 %v420
        %871 = vmatpush.msra.mxu0 %v416
        %872 = vmatpush.msra.mxu0 %v412
        %873 = vmatpush.msra.mxu0 %v408
        %874 = vmatpush.msra.mxu0 %v404
        %875 = vmatpush.msra.mxu0 %v400
        %876 = vmatpush.msra.mxu0 %v396
        %877 = vmatpush.msra.mxu0 %v392
        %878 = vmatpush.msra.mxu0 %v388
        %879 = vmatmul.f32.gmra.mxu0 %v712
        %v880 = vpop.f32.mrf.mxu0
        %v881 = vadd.f32 %v861, %v880
        %882 = vdwg.mxu0
        %883 = vmatpush.msra.mxu0 %v512
        %884 = vmatpush.msra.mxu0 %v508
        %885 = vmatpush.msra.mxu0 %v504
        %886 = vmatpush.msra.mxu0 %v500
        %887 = vmatpush.msra.mxu0 %v496
        %888 = vmatpush.msra.mxu0 %v492
        %889 = vmatpush.msra.mxu0 %v488
        %890 = vmatpush.msra.mxu0 %v484
        %891 = vmatpush.msra.mxu0 %v480
        %892 = vmatpush.msra.mxu0 %v476
        %893 = vmatpush.msra.mxu0 %v472
        %894 = vmatpush.msra.mxu0 %v468
        %895 = vmatpush.msra.mxu0 %v464
        %896 = vmatpush.msra.mxu0 %v460
        %897 = vmatpush.msra.mxu0 %v456
        %898 = vmatpush.msra.mxu0 %v452
        %899 = vmatmul.f32.gmra.mxu0 %v713
        %v900 = vpop.f32.mrf.mxu0
        %v901 = vadd.f32 %v881, %v900
        %902 = vdwg.mxu0
        %903 = vmatpush.msra.mxu0 %v385
        %904 = vmatpush.msra.mxu0 %v381
        %905 = vmatpush.msra.mxu0 %v377
        %906 = vmatpush.msra.mxu0 %v373
        %907 = vmatpush.msra.mxu0 %v369
        %908 = vmatpush.msra.mxu0 %v365
        %909 = vmatpush.msra.mxu0 %v361
        %910 = vmatpush.msra.mxu0 %v357
        %911 = vmatpush.msra.mxu0 %v353
        %912 = vmatpush.msra.mxu0 %v349
        %913 = vmatpush.msra.mxu0 %v345
        %914 = vmatpush.msra.mxu0 %v341
        %915 = vmatpush.msra.mxu0 %v337
        %916 = vmatpush.msra.mxu0 %v333
        %917 = vmatpush.msra.mxu0 %v329
        %918 = vmatpush.msra.mxu0 %v325
        %919 = vmatmul.f32.gmra.mxu0 %v711
        %v920 = vpop.f32.mrf.mxu0
        %v921 = vadd.f32 %v718, %v920
        %922 = vdwg.mxu0
        %923 = vmatpush.msra.mxu0 %v449
        %924 = vmatpush.msra.mxu0 %v445
        %925 = vmatpush.msra.mxu0 %v441
        %926 = vmatpush.msra.mxu0 %v437
        %927 = vmatpush.msra.mxu0 %v433
        %928 = vmatpush.msra.mxu0 %v429
        %929 = vmatpush.msra.mxu0 %v425
        %930 = vmatpush.msra.mxu0 %v421
        %931 = vmatpush.msra.mxu0 %v417
        %932 = vmatpush.msra.mxu0 %v413
        %933 = vmatpush.msra.mxu0 %v409
        %934 = vmatpush.msra.mxu0 %v405
        %935 = vmatpush.msra.mxu0 %v401
        %936 = vmatpush.msra.mxu0 %v397
        %937 = vmatpush.msra.mxu0 %v393
        %938 = vmatpush.msra.mxu0 %v389
        %939 = vmatmul.f32.gmra.mxu0 %v712
        %v940 = vpop.f32.mrf.mxu0
        %v941 = vadd.f32 %v921, %v940
        %942 = vdwg.mxu0
        %943 = vmatpush.msra.mxu0 %v513
        %944 = vmatpush.msra.mxu0 %v509
        %945 = vmatpush.msra.mxu0 %v505
        %946 = vmatpush.msra.mxu0 %v501
        %947 = vmatpush.msra.mxu0 %v497
        %948 = vmatpush.msra.mxu0 %v493
        %949 = vmatpush.msra.mxu0 %v489
        %950 = vmatpush.msra.mxu0 %v485
        %951 = vmatpush.msra.mxu0 %v481
        %952 = vmatpush.msra.mxu0 %v477
        %953 = vmatpush.msra.mxu0 %v473
        %954 = vmatpush.msra.mxu0 %v469
        %955 = vmatpush.msra.mxu0 %v465
        %956 = vmatpush.msra.mxu0 %v461
        %957 = vmatpush.msra.mxu0 %v457
        %958 = vmatpush.msra.mxu0 %v453
        %959 = vmatmul.f32.gmra.mxu0 %v713
        %v960 = vpop.f32.mrf.mxu0
        %v961 = vadd.f32 %v941, %v960
        %962 = vdwg.mxu0
        %v963 = vmul.f32 %v781, 0.5
        %v964 = vmul.f32 %v841, 0.5
        %v965 = vmul.f32 %v901, 0.5
        %v966 = vmul.f32 %v961, 0.5
        %v967 = vmul.f32 %v781, 0.70710677
        %v968 = vmul.f32 %v841, 0.70710677
        %v969 = vmul.f32 %v901, 0.70710677
        %v970 = vmul.f32 %v961, 0.70710677
        %v971 = vmul.f32 %v967, %v967
        %v972 = vmin.f32 16.0, %v971
        %v973 = vmul.f32 %v972, 2.1237322e-06
        %v974 = vadd.f32 %v973, 0.00028619796
        %v975 = vmul.f32 %v972, %v974
        %v976 = vadd.f32 %v975, 0.0036580483
        %v977 = vmul.f32 %v972, %v976
        %v978 = vadd.f32 %v977, 0.05243302
        %v979 = vmul.f32 %v972, %v978
        %v980 = vadd.f32 %v979, 0.18741608
        %v981 = vmul.f32 %v972, %v980
        %v982 = vadd.f32 %v981, 1.1283791
        %v983 = vmul.f32 %v967, %v982
        %v984 = vmul.f32 %v972, 3.8918573e-05
        %v985 = vadd.f32 %v984, 0.001143296
        %v986 = vmul.f32 %v972, %v985
        %v987 = vadd.f32 %v986, 0.014752088
        %v988 = vmul.f32 %v972, %v987
        %v989 = vadd.f32 %v988, 0.112945676
        %v990 = vmul.f32 %v972, %v989
        %v991 = vadd.f32 %v990, 0.4994258
        %v992 = vmul.f32 %v972, %v991
        %v993 = vadd.f32 %v992, 1.0
        %v994 = vrcp.pop %v993
        %v995 = vmul.f32 %v993, %v994
        %v996 = vsub.f32 1.0, %v995
        %v997 = vmul.f32 %v994, %v996
        %v998 = vadd.f32 %v994, %v997
        %vm999 = vweird.f32 %v993
        %vm1000 = vweird.f32 %v994
        %vm1001 = vmor %vm999, %vm1000
        %v1002 = vsel %vm1001, %v994, %v998
        %v1003 = vand.u32 2147483647, %v993
        %vm1004 = vcmp.eq.f32.partialorder %v1003, 8.507059e+37
        %v1005 = vand.u32 %v993, 2147483648
        %v1006 = vor.u32 1.1754944e-38, %v1005
        %v1007 = vsel %vm1004, %v1006, %v1002
        %v1008 = vmul.f32 %v983, %v1007
        %v1009 = vmin.f32 %v1008, 1.0
        %v1010 = vmax.f32 %v1009, -1.0
        %v1011 = vmul.f32 %v968, %v968
        %v1012 = vmin.f32 16.0, %v1011
        %v1013 = vmul.f32 %v1012, 2.1237322e-06
        %v1014 = vadd.f32 %v1013, 0.00028619796
        %v1015 = vmul.f32 %v1012, %v1014
        %v1016 = vadd.f32 %v1015, 0.0036580483
        %v1017 = vmul.f32 %v1012, %v1016
        %v1018 = vadd.f32 %v1017, 0.05243302
        %v1019 = vmul.f32 %v1012, %v1018
        %v1020 = vadd.f32 %v1019, 0.18741608
        %v1021 = vmul.f32 %v1012, %v1020
        %v1022 = vadd.f32 %v1021, 1.1283791
        %v1023 = vmul.f32 %v968, %v1022
        %v1024 = vmul.f32 %v1012, 3.8918573e-05
        %v1025 = vadd.f32 %v1024, 0.001143296
        %v1026 = vmul.f32 %v1012, %v1025
        %v1027 = vadd.f32 %v1026, 0.014752088
        %v1028 = vmul.f32 %v1012, %v1027
        %v1029 = vadd.f32 %v1028, 0.112945676
        %v1030 = vmul.f32 %v1012, %v1029
        %v1031 = vadd.f32 %v1030, 0.4994258
        %v1032 = vmul.f32 %v1012, %v1031
        %v1033 = vadd.f32 %v1032, 1.0
        %v1034 = vrcp.pop %v1033
        %v1035 = vmul.f32 %v1033, %v1034
        %v1036 = vsub.f32 1.0, %v1035
        %v1037 = vmul.f32 %v1034, %v1036
        %v1038 = vadd.f32 %v1034, %v1037
        %vm1039 = vweird.f32 %v1033
        %vm1040 = vweird.f32 %v1034
        %vm1041 = vmor %vm1039, %vm1040
        %v1042 = vsel %vm1041, %v1034, %v1038
        %v1043 = vand.u32 2147483647, %v1033
        %vm1044 = vcmp.eq.f32.partialorder %v1043, 8.507059e+37
        %v1045 = vand.u32 %v1033, 2147483648
        %v1046 = vor.u32 1.1754944e-38, %v1045
        %v1047 = vsel %vm1044, %v1046, %v1042
        %v1048 = vmul.f32 %v1023, %v1047
        %v1049 = vmin.f32 %v1048, 1.0
        %v1050 = vmax.f32 %v1049, -1.0
        %v1051 = vmul.f32 %v969, %v969
        %v1052 = vmin.f32 16.0, %v1051
        %v1053 = vmul.f32 %v1052, 2.1237322e-06
        %v1054 = vadd.f32 %v1053, 0.00028619796
        %v1055 = vmul.f32 %v1052, %v1054
        %v1056 = vadd.f32 %v1055, 0.0036580483
        %v1057 = vmul.f32 %v1052, %v1056
        %v1058 = vadd.f32 %v1057, 0.05243302
        %v1059 = vmul.f32 %v1052, %v1058
        %v1060 = vadd.f32 %v1059, 0.18741608
        %v1061 = vmul.f32 %v1052, %v1060
        %v1062 = vadd.f32 %v1061, 1.1283791
        %v1063 = vmul.f32 %v969, %v1062
        %v1064 = vmul.f32 %v1052, 3.8918573e-05
        %v1065 = vadd.f32 %v1064, 0.001143296
        %v1066 = vmul.f32 %v1052, %v1065
        %v1067 = vadd.f32 %v1066, 0.014752088
        %v1068 = vmul.f32 %v1052, %v1067
        %v1069 = vadd.f32 %v1068, 0.112945676
        %v1070 = vmul.f32 %v1052, %v1069
        %v1071 = vadd.f32 %v1070, 0.4994258
        %v1072 = vmul.f32 %v1052, %v1071
        %v1073 = vadd.f32 %v1072, 1.0
        %v1074 = vrcp.pop %v1073
        %v1075 = vmul.f32 %v1073, %v1074
        %v1076 = vsub.f32 1.0, %v1075
        %v1077 = vmul.f32 %v1074, %v1076
        %v1078 = vadd.f32 %v1074, %v1077
        %vm1079 = vweird.f32 %v1073
        %vm1080 = vweird.f32 %v1074
        %vm1081 = vmor %vm1079, %vm1080
        %v1082 = vsel %vm1081, %v1074, %v1078
        %v1083 = vand.u32 2147483647, %v1073
        %vm1084 = vcmp.eq.f32.partialorder %v1083, 8.507059e+37
        %v1085 = vand.u32 %v1073, 2147483648
        %v1086 = vor.u32 1.1754944e-38, %v1085
        %v1087 = vsel %vm1084, %v1086, %v1082
        %v1088 = vmul.f32 %v1063, %v1087
        %v1089 = vmin.f32 %v1088, 1.0
        %v1090 = vmax.f32 %v1089, -1.0
        %v1091 = vmul.f32 %v970, %v970
        %v1092 = vmin.f32 16.0, %v1091
        %v1093 = vmul.f32 %v1092, 2.1237322e-06
        %v1094 = vadd.f32 %v1093, 0.00028619796
        %v1095 = vmul.f32 %v1092, %v1094
        %v1096 = vadd.f32 %v1095, 0.0036580483
        %v1097 = vmul.f32 %v1092, %v1096
        %v1098 = vadd.f32 %v1097, 0.05243302
        %v1099 = vmul.f32 %v1092, %v1098
        %v1100 = vadd.f32 %v1099, 0.18741608
        %v1101 = vmul.f32 %v1092, %v1100
        %v1102 = vadd.f32 %v1101, 1.1283791
        %v1103 = vmul.f32 %v970, %v1102
        %v1104 = vmul.f32 %v1092, 3.8918573e-05
        %v1105 = vadd.f32 %v1104, 0.001143296
        %v1106 = vmul.f32 %v1092, %v1105
        %v1107 = vadd.f32 %v1106, 0.014752088
        %v1108 = vmul.f32 %v1092, %v1107
        %v1109 = vadd.f32 %v1108, 0.112945676
        %v1110 = vmul.f32 %v1092, %v1109
        %v1111 = vadd.f32 %v1110, 0.4994258
        %v1112 = vmul.f32 %v1092, %v1111
        %v1113 = vadd.f32 %v1112, 1.0
        %v1114 = vrcp.pop %v1113
        %v1115 = vmul.f32 %v1113, %v1114
        %v1116 = vsub.f32 1.0, %v1115
        %v1117 = vmul.f32 %v1114, %v1116
        %v1118 = vadd.f32 %v1114, %v1117
        %vm1119 = vweird.f32 %v1113
        %vm1120 = vweird.f32 %v1114
        %vm1121 = vmor %vm1119, %vm1120
        %v1122 = vsel %vm1121, %v1114, %v1118
        %v1123 = vand.u32 2147483647, %v1113
        %vm1124 = vcmp.eq.f32.partialorder %v1123, 8.507059e+37
        %v1125 = vand.u32 %v1113, 2147483648
        %v1126 = vor.u32 1.1754944e-38, %v1125
        %v1127 = vsel %vm1124, %v1126, %v1122
        %v1128 = vmul.f32 %v1103, %v1127
        %v1129 = vmin.f32 %v1128, 1.0
        %v1130 = vmax.f32 %v1129, -1.0
        %v1131 = vadd.f32 %v1010, 1.0
        %v1132 = vadd.f32 %v1050, 1.0
        %v1133 = vadd.f32 %v1090, 1.0
        %v1134 = vadd.f32 %v1130, 1.0
        %v1135 = vmul.f32 %v963, %v1131
        %v1136 = vmul.f32 %v964, %v1132
        %v1137 = vmul.f32 %v965, %v1133
        %v1138 = vmul.f32 %v966, %v1134
        %1139 = vmatpush.msra.mxu0 %v564
        %1140 = vmatpush.msra.mxu0 %v561
        %1141 = vmatpush.msra.mxu0 %v558
        %1142 = vmatpush.msra.mxu0 %v555
        %1143 = vmatpush.msra.mxu0 %v552
        %1144 = vmatpush.msra.mxu0 %v549
        %1145 = vmatpush.msra.mxu0 %v546
        %1146 = vmatpush.msra.mxu0 %v543
        %1147 = vmatpush.msra.mxu0 %v540
        %1148 = vmatpush.msra.mxu0 %v537
        %1149 = vmatpush.msra.mxu0 %v534
        %1150 = vmatpush.msra.mxu0 %v531
        %1151 = vmatpush.msra.mxu0 %v528
        %1152 = vmatpush.msra.mxu0 %v525
        %1153 = vmatpush.msra.mxu0 %v522
        %1154 = vmatpush.msra.mxu0 %v519
        %1155 = vmatmul.f32.gmra.mxu0 %v1135
        %v1156 = vpop.f32.mrf.mxu0
        %v1157 = vadd.f32 0.0, %v1156
        %1158 = vdwg.mxu0
        %1159 = vmatpush.msra.mxu0 %v612
        %1160 = vmatpush.msra.mxu0 %v609
        %1161 = vmatpush.msra.mxu0 %v606
        %1162 = vmatpush.msra.mxu0 %v603
        %1163 = vmatpush.msra.mxu0 %v600
        %1164 = vmatpush.msra.mxu0 %v597
        %1165 = vmatpush.msra.mxu0 %v594
        %1166 = vmatpush.msra.mxu0 %v591
        %1167 = vmatpush.msra.mxu0 %v588
        %1168 = vmatpush.msra.mxu0 %v585
        %1169 = vmatpush.msra.mxu0 %v582
        %1170 = vmatpush.msra.mxu0 %v579
        %1171 = vmatpush.msra.mxu0 %v576
        %1172 = vmatpush.msra.mxu0 %v573
        %1173 = vmatpush.msra.mxu0 %v570
        %1174 = vmatpush.msra.mxu0 %v567
        %1175 = vmatmul.f32.gmra.mxu0 %v1136
        %v1176 = vpop.f32.mrf.mxu0
        %v1177 = vadd.f32 %v1157, %v1176
        %1178 = vdwg.mxu0
        %1179 = vmatpush.msra.mxu0 %v660
        %1180 = vmatpush.msra.mxu0 %v657
        %1181 = vmatpush.msra.mxu0 %v654
        %1182 = vmatpush.msra.mxu0 %v651
        %1183 = vmatpush.msra.mxu0 %v648
        %1184 = vmatpush.msra.mxu0 %v645
        %1185 = vmatpush.msra.mxu0 %v642
        %1186 = vmatpush.msra.mxu0 %v639
        %1187 = vmatpush.msra.mxu0 %v636
        %1188 = vmatpush.msra.mxu0 %v633
        %1189 = vmatpush.msra.mxu0 %v630
        %1190 = vmatpush.msra.mxu0 %v627
        %1191 = vmatpush.msra.mxu0 %v624
        %1192 = vmatpush.msra.mxu0 %v621
        %1193 = vmatpush.msra.mxu0 %v618
        %1194 = vmatpush.msra.mxu0 %v615
        %1195 = vmatmul.f32.gmra.mxu0 %v1137
        %v1196 = vpop.f32.mrf.mxu0
        %v1197 = vadd.f32 %v1177, %v1196
        %1198 = vdwg.mxu0
        %1199 = vmatpush.msra.mxu0 %v708
        %1200 = vmatpush.msra.mxu0 %v705
        %1201 = vmatpush.msra.mxu0 %v702
        %1202 = vmatpush.msra.mxu0 %v699
        %1203 = vmatpush.msra.mxu0 %v696
        %1204 = vmatpush.msra.mxu0 %v693
        %1205 = vmatpush.msra.mxu0 %v690
        %1206 = vmatpush.msra.mxu0 %v687
        %1207 = vmatpush.msra.mxu0 %v684
        %1208 = vmatpush.msra.mxu0 %v681
        %1209 = vmatpush.msra.mxu0 %v678
        %1210 = vmatpush.msra.mxu0 %v675
        %1211 = vmatpush.msra.mxu0 %v672
        %1212 = vmatpush.msra.mxu0 %v669
        %1213 = vmatpush.msra.mxu0 %v666
        %1214 = vmatpush.msra.mxu0 %v663
        %1215 = vmatmul.f32.gmra.mxu0 %v1138
        %v1216 = vpop.f32.mrf.mxu0
        %v1217 = vadd.f32 %v1197, %v1216
        %1218 = vdwg.mxu0
        %1219 = vmatpush.msra.mxu0 %v565
        %1220 = vmatpush.msra.mxu0 %v562
        %1221 = vmatpush.msra.mxu0 %v559
        %1222 = vmatpush.msra.mxu0 %v556
        %1223 = vmatpush.msra.mxu0 %v553
        %1224 = vmatpush.msra.mxu0 %v550
        %1225 = vmatpush.msra.mxu0 %v547
        %1226 = vmatpush.msra.mxu0 %v544
        %1227 = vmatpush.msra.mxu0 %v541
        %1228 = vmatpush.msra.mxu0 %v538
        %1229 = vmatpush.msra.mxu0 %v535
        %1230 = vmatpush.msra.mxu0 %v532
        %1231 = vmatpush.msra.mxu0 %v529
        %1232 = vmatpush.msra.mxu0 %v526
        %1233 = vmatpush.msra.mxu0 %v523
        %1234 = vmatpush.msra.mxu0 %v520
        %1235 = vmatmul.f32.gmra.mxu0 %v1135
        %v1236 = vpop.f32.mrf.mxu0
        %v1237 = vadd.f32 0.0, %v1236
        %1238 = vdwg.mxu0
        %1239 = vmatpush.msra.mxu0 %v613
        %1240 = vmatpush.msra.mxu0 %v610
        %1241 = vmatpush.msra.mxu0 %v607
        %1242 = vmatpush.msra.mxu0 %v604
        %1243 = vmatpush.msra.mxu0 %v601
        %1244 = vmatpush.msra.mxu0 %v598
        %1245 = vmatpush.msra.mxu0 %v595
        %1246 = vmatpush.msra.mxu0 %v592
        %1247 = vmatpush.msra.mxu0 %v589
        %1248 = vmatpush.msra.mxu0 %v586
        %1249 = vmatpush.msra.mxu0 %v583
        %1250 = vmatpush.msra.mxu0 %v580
        %1251 = vmatpush.msra.mxu0 %v577
        %1252 = vmatpush.msra.mxu0 %v574
        %1253 = vmatpush.msra.mxu0 %v571
        %1254 = vmatpush.msra.mxu0 %v568
        %1255 = vmatmul.f32.gmra.mxu0 %v1136
        %v1256 = vpop.f32.mrf.mxu0
        %v1257 = vadd.f32 %v1237, %v1256
        %1258 = vdwg.mxu0
        %1259 = vmatpush.msra.mxu0 %v661
        %1260 = vmatpush.msra.mxu0 %v658
        %1261 = vmatpush.msra.mxu0 %v655
        %1262 = vmatpush.msra.mxu0 %v652
        %1263 = vmatpush.msra.mxu0 %v649
        %1264 = vmatpush.msra.mxu0 %v646
        %1265 = vmatpush.msra.mxu0 %v643
        %1266 = vmatpush.msra.mxu0 %v640
        %1267 = vmatpush.msra.mxu0 %v637
        %1268 = vmatpush.msra.mxu0 %v634
        %1269 = vmatpush.msra.mxu0 %v631
        %1270 = vmatpush.msra.mxu0 %v628
        %1271 = vmatpush.msra.mxu0 %v625
        %1272 = vmatpush.msra.mxu0 %v622
        %1273 = vmatpush.msra.mxu0 %v619
        %1274 = vmatpush.msra.mxu0 %v616
        %1275 = vmatmul.f32.gmra.mxu0 %v1137
        %v1276 = vpop.f32.mrf.mxu0
        %v1277 = vadd.f32 %v1257, %v1276
        %1278 = vdwg.mxu0
        %1279 = vmatpush.msra.mxu0 %v709
        %1280 = vmatpush.msra.mxu0 %v706
        %1281 = vmatpush.msra.mxu0 %v703
        %1282 = vmatpush.msra.mxu0 %v700
        %1283 = vmatpush.msra.mxu0 %v697
        %1284 = vmatpush.msra.mxu0 %v694
        %1285 = vmatpush.msra.mxu0 %v691
        %1286 = vmatpush.msra.mxu0 %v688
        %1287 = vmatpush.msra.mxu0 %v685
        %1288 = vmatpush.msra.mxu0 %v682
        %1289 = vmatpush.msra.mxu0 %v679
        %1290 = vmatpush.msra.mxu0 %v676
        %1291 = vmatpush.msra.mxu0 %v673
        %1292 = vmatpush.msra.mxu0 %v670
        %1293 = vmatpush.msra.mxu0 %v667
        %1294 = vmatpush.msra.mxu0 %v664
        %1295 = vmatmul.f32.gmra.mxu0 %v1138
        %v1296 = vpop.f32.mrf.mxu0
        %v1297 = vadd.f32 %v1277, %v1296
        %1298 = vdwg.mxu0
        %1299 = vmatpush.msra.mxu0 %v566
        %1300 = vmatpush.msra.mxu0 %v563
        %1301 = vmatpush.msra.mxu0 %v560
        %1302 = vmatpush.msra.mxu0 %v557
        %1303 = vmatpush.msra.mxu0 %v554
        %1304 = vmatpush.msra.mxu0 %v551
        %1305 = vmatpush.msra.mxu0 %v548
        %1306 = vmatpush.msra.mxu0 %v545
        %1307 = vmatpush.msra.mxu0 %v542
        %1308 = vmatpush.msra.mxu0 %v539
        %1309 = vmatpush.msra.mxu0 %v536
        %1310 = vmatpush.msra.mxu0 %v533
        %1311 = vmatpush.msra.mxu0 %v530
        %1312 = vmatpush.msra.mxu0 %v527
        %1313 = vmatpush.msra.mxu0 %v524
        %1314 = vmatpush.msra.mxu0 %v521
        %1315 = vmatmul.f32.gmra.mxu0 %v1135
        %v1316 = vpop.f32.mrf.mxu0
        %v1317 = vadd.f32 0.0, %v1316
        %1318 = vdwg.mxu0
        %1319 = vmatpush.msra.mxu0 %v614
        %1320 = vmatpush.msra.mxu0 %v611
        %1321 = vmatpush.msra.mxu0 %v608
        %1322 = vmatpush.msra.mxu0 %v605
        %1323 = vmatpush.msra.mxu0 %v602
        %1324 = vmatpush.msra.mxu0 %v599
        %1325 = vmatpush.msra.mxu0 %v596
        %1326 = vmatpush.msra.mxu0 %v593
        %1327 = vmatpush.msra.mxu0 %v590
        %1328 = vmatpush.msra.mxu0 %v587
        %1329 = vmatpush.msra.mxu0 %v584
        %1330 = vmatpush.msra.mxu0 %v581
        %1331 = vmatpush.msra.mxu0 %v578
        %1332 = vmatpush.msra.mxu0 %v575
        %1333 = vmatpush.msra.mxu0 %v572
        %1334 = vmatpush.msra.mxu0 %v569
        %1335 = vmatmul.f32.gmra.mxu0 %v1136
        %v1336 = vpop.f32.mrf.mxu0
        %v1337 = vadd.f32 %v1317, %v1336
        %1338 = vdwg.mxu0
        %1339 = vmatpush.msra.mxu0 %v662
        %1340 = vmatpush.msra.mxu0 %v659
        %1341 = vmatpush.msra.mxu0 %v656
        %1342 = vmatpush.msra.mxu0 %v653
        %1343 = vmatpush.msra.mxu0 %v650
        %1344 = vmatpush.msra.mxu0 %v647
        %1345 = vmatpush.msra.mxu0 %v644
        %1346 = vmatpush.msra.mxu0 %v641
        %1347 = vmatpush.msra.mxu0 %v638
        %1348 = vmatpush.msra.mxu0 %v635
        %1349 = vmatpush.msra.mxu0 %v632
        %1350 = vmatpush.msra.mxu0 %v629
        %1351 = vmatpush.msra.mxu0 %v626
        %1352 = vmatpush.msra.mxu0 %v623
        %1353 = vmatpush.msra.mxu0 %v620
        %1354 = vmatpush.msra.mxu0 %v617
        %1355 = vmatmul.f32.gmra.mxu0 %v1137
        %v1356 = vpop.f32.mrf.mxu0
        %v1357 = vadd.f32 %v1337, %v1356
        %1358 = vdwg.mxu0
        %1359 = vmatpush.msra.mxu0 %v710
        %1360 = vmatpush.msra.mxu0 %v707
        %1361 = vmatpush.msra.mxu0 %v704
        %1362 = vmatpush.msra.mxu0 %v701
        %1363 = vmatpush.msra.mxu0 %v698
        %1364 = vmatpush.msra.mxu0 %v695
        %1365 = vmatpush.msra.mxu0 %v692
        %1366 = vmatpush.msra.mxu0 %v689
        %1367 = vmatpush.msra.mxu0 %v686
        %1368 = vmatpush.msra.mxu0 %v683
        %1369 = vmatpush.msra.mxu0 %v680
        %1370 = vmatpush.msra.mxu0 %v677
        %1371 = vmatpush.msra.mxu0 %v674
        %1372 = vmatpush.msra.mxu0 %v671
        %1373 = vmatpush.msra.mxu0 %v668
        %1374 = vmatpush.msra.mxu0 %v665
        %1375 = vmatmul.f32.gmra.mxu0 %v1138
        %v1376 = vpop.f32.mrf.mxu0
        %v1377 = vadd.f32 %v1357, %v1376
        %1378 = vdwg.mxu0
        %p1379 = scmp.eq.s32.totalorder %s29, 0
        // Predicated region
        $region61: #{tpu_custom_call.1} parent=39 // pred_check
          %p1380 = pneg %p1379
        $region62: #{tpu_custom_call.1} parent=39 // pred_check_branch
          %1382 = sbr.rel (%p1380) target = $region64
        $region63: #{tpu_custom_call.1} parent=39 // pred_region
          %1383 = vst [vmem:[%s318] sm:$0xff] %v1217
          %1384 = vst [vmem:[%s318 + $0x8] sm:$0xff] %v1297
          %1385 = vst [vmem:[%s318 + $0x10] sm:$0xff] %v1377
        $region64: #{tpu_custom_call.1} parent=39 // pred_fallthru
          _
        %p1386 = scmp.gt.s32.totalorder %s29, 0
        // Predicated region
        $region65: #{tpu_custom_call.1} parent=39 // pred_check
          %p1387 = pneg %p1386
        $region66: #{tpu_custom_call.1} parent=39 // pred_check_branch
          %1389 = sbr.rel (%p1387) target = $region68
        $region67: #{tpu_custom_call.1} parent=39 // pred_region
          %v1390 = vld [vmem:[%s318] sm:$0xff]
          %v1391 = vld [vmem:[%s318 + $0x8] sm:$0xff]
          %v1392 = vld [vmem:[%s318 + $0x10] sm:$0xff]
          %v1393 = vadd.f32 %v1390, %v1217
          %v1394 = vadd.f32 %v1391, %v1297
          %v1395 = vadd.f32 %v1392, %v1377
          %1396 = vst [vmem:[%s318] sm:$0xff] %v1393
          %1397 = vst [vmem:[%s318 + $0x8] sm:$0xff] %v1394
          %1398 = vst [vmem:[%s318 + $0x10] sm:$0xff] %v1395
        $region68: #{tpu_custom_call.1} parent=39 // pred_fallthru
          _
        %p1399 = scmp.eq.s32.totalorder %s29, 2
        // Predicated region
        $region69: #{tpu_custom_call.1} parent=39 // pred_check
          %p1400 = pneg %p1399
        $region70: #{tpu_custom_call.1} parent=39 // pred_check_branch
          %1402 = sbr.rel (%p1400) target = $region72
        $region71: #{tpu_custom_call.1} parent=39 // pred_region
          %v1403 = vld [vmem:[%s318] sm:$0xff]
          %v1404 = vld [vmem:[%s318 + $0x8] sm:$0xff]
          %v1405 = vld [vmem:[%s318 + $0x10] sm:$0xff]
          %v1406 = vld [vmem:[#allocation10] sm:$0x7]
          %v1408 = vperm.slane %v1406, 0
          %v1409 = vperm.slane %v1406, 1
          %v1410 = vperm.slane %v1406, 2
          %v1414 = vadd.f32 %v1403, %v1408
          %v1415 = vadd.f32 %v1404, %v1409
          %v1416 = vadd.f32 %v1405, %v1410
          %1417 = vst [vmem:[%s318] sm:$0xff] %v1414
          %1418 = vst [vmem:[%s318 + $0x8] sm:$0xff] %v1415
          %1419 = vst [vmem:[%s318 + $0x10] sm:$0xff] %v1416
        $region72: #{tpu_custom_call.1} parent=39 // pred_fallthru
          _
        %s1420 = sand.u32 %s154, 1
        %s1421 = scalar_lea.sflag [#allocation4], %s1420
        %s1422 = sand.u32 %s154, 1
        %s1423 = smul.addr %s1422, 24
        %s1424 = scalar_lea.vmem [#allocation11], %s1423
        // Predicated region
        $region73: #{tpu_custom_call.1} parent=39 // pred_check
          %p1425 = pneg %p164
        $region74: #{tpu_custom_call.1} parent=39 // pred_check_branch
          %1427 = sbr.rel (%p1425) target = $region76
        $region75: #{tpu_custom_call.1} parent=39 // pred_region
          %1429 = vsyncadd %s1421, 0
          %s1430 = smul.addr %s28, 3
          %s1431 = smul.addr %s1430, 8
          %s1432 = scalar_lea.hbm %s5, %s1431
          %s1434 = sshll.u32 %s1424, 4
          %s1435 = int_to_ptr.vmem [resolvable:$true] %s1434
          %s1436 = sshll.u32 %s1432, 4
          %s1437 = int_to_ptr.hbm [resolvable:$true] %s1436
          %1439 = dma.vmem_to_hbm [thread:$0]  %s1435, 384, %s1437, %s1421
        $region76: #{tpu_custom_call.1} parent=39 // pred_fallthru
          _
      $region40: #{tpu_custom_call.1} parent=5 // pred_fallthru
        _
      %p1440 = scmp.le.s32.totalorder 2, %s19
      // Predicated region
      $region77: #{tpu_custom_call.1} parent=5 // pred_check
        %p1441 = pneg %p1440
      $region78: #{tpu_custom_call.1} parent=5 // pred_check_branch
        %1443 = sbr.rel (%p1441) target = $region80
      $region79: #{tpu_custom_call.1} parent=5 // pred_region
        %s1444 = ssub.s32 %s19, 2
        // Predicated region
        $region81: #{tpu_custom_call.1} parent=79 // pred_check
          %p1445 = pneg %p170
        $region82: #{tpu_custom_call.1} parent=79 // pred_check_branch
          %1447 = sbr.rel (%p1445) target = $region84
        $region83: #{tpu_custom_call.1} parent=79 // pred_region
          %s1448 = sand.u32 %s155, 1
          %s1449 = scalar_lea.sflag [#allocation4], %s1448
          %s1450 = sand.u32 %s155, 1
          %s1451 = smul.addr %s1450, 24
          %s1452 = scalar_lea.vmem [#allocation11], %s1451
          %1454 = dma.done %s1449, 384
        $region84: #{tpu_custom_call.1} parent=79 // pred_fallthru
          _
      $region80: #{tpu_custom_call.1} parent=5 // pred_fallthru
        _
    $region6: #{tpu_custom_call.1} parent=1 // loop_footer
      %s23 = sadd.s32 1, %s19
    $region7: #{tpu_custom_call.1} parent=1 // loop_footer_branch
      %18 = sbr.rel target = $region3
    $region8: #{tpu_custom_call.1} parent=1 // loop_exit
      _
    %1455 = vsyncpa [#allocation3], 1
    %s1456 = scalar_lea.sflag [#allocation3], 1
    %1457 = vsyncpa %s1456, 1
    %1458 = vsyncpa [#allocation6], 1
    %1459 = vsyncpa [#allocation9], 1
    %1460 = vsyncpa [#allocation4], 1
    %s1461 = scalar_lea.sflag [#allocation4], 1
    %1462 = vsyncpa %s1461, 1

</llo_original>
